<compile_context>
chip_gen: v7x
topology: tpu7x:2x2x1
jax: 0.10.0
libtpu: 0.0.40
codegen_flags: <defaults>
</compile_context>

<pallas_src>
import functools
import math
from dataclasses import dataclass

import jax
import jax.numpy as jnp
from jax.experimental import pallas as pl
from jax.experimental.pallas import tpu as pltpu

# Set to jnp.bfloat16 on v6e / v7x to hit MXU peak (f32 accumulation is kept);
# left at f32 by default to preserve reference numerics exactly (and v5e has no
# bf16 VPU).
MATMUL_COMPUTE_DTYPE = jnp.float32


# ----------------------------- model args ----------------------------------
@dataclass
class ModelArgs:
    max_batch_size: int = 8
    max_seq_len: int = 128
    vocab_size: int = 10
    dim: int = 128
    inter_dim: int = 256
    n_layers: int = 1
    n_heads: int = 1
    input_dim: int = 10
    q_lora_rank: int = 64
    kv_lora_rank: int = 64
    qk_nope_head_dim: int = 64
    qk_rope_head_dim: int = 64
    v_head_dim: int = 128
    original_seq_len: int = 128
    rope_theta: float = 10000.0
    rope_factor: float = 40.0
    beta_fast: int = 32
    beta_slow: int = 1
    mscale: float = 1.0


# ----------------------------- spec helpers --------------------------------
def _full_spec(shape):
    """Whole-array block for a grid=(1,) kernel."""
    zeros = (0,) * len(shape)
    return pl.BlockSpec(tuple(shape), lambda i: zeros)


# ----------------------------- in-kernel helpers ----------------------------
def _dyt(x, p):
    # p: (3, C) stacked rows = [alpha (broadcast to C), gamma, beta]
    return jnp.tanh(x * p[0:1, :]) * p[1:2, :] + p[2:3, :]


def _mm(a, b):
    # (M, K) @ (K, N) -> (M, N), f32 accumulation on the MXU.
    return jnp.dot(a.astype(MATMUL_COMPUTE_DTYPE), b.astype(MATMUL_COMPUTE_DTYPE),
                   preferred_element_type=jnp.float32)


def _mm_nt(a, b):
    # (M, K) x (N, K) -> (M, N): contract last dims without an explicit transpose.
    return jax.lax.dot_general(
        a.astype(MATMUL_COMPUTE_DTYPE), b.astype(MATMUL_COMPUTE_DTYPE),
        (((1,), (1,)), ((), ())), preferred_element_type=jnp.float32)


# ----------------------------- Pallas kernels ------------------------------
def _embed_kernel(x_ref, w_ref, b_ref, o_ref):
    o_ref[...] = _mm(x_ref[...], w_ref[...]) + b_ref[...]


def _mla_kernel(x_ref, attn_dyt_ref,
                wqa_ref, bqa_ref, q_dyt_ref, wqb_ref, bqb_ref,
                wkva_ref, bkva_ref, kv_dyt_ref, wkvb_ref, bkvb_ref,
                wo_ref, bo_ref,
                cos_ref, sin_ref, perm_ref, mask_ref,
                o_ref, *, n_heads, nope, rope_d, v_dim, kv_rank, scale):
    """Fused: attn_norm + MLA attention + wo + residual add.  x: (M, D)."""
    x = x_ref[...]
    xn = _dyt(x, attn_dyt_ref[...])                       # attn_norm(x)

    # ---- query path: wq_b(DyT(wq_a(xn)))
    q_lat = _dyt(_mm(xn, wqa_ref[...]) + bqa_ref[...], q_dyt_ref[...])
    q = _mm(q_lat, wqb_ref[...]) + bqb_ref[...]           # (M, H*(nope+rope))

    # ---- key/value latent path
    kv = _mm(xn, wkva_ref[...]) + bkva_ref[...]           # (M, kv_rank + rope)
    kv_c = kv[:, :kv_rank]
    k_pe = kv[:, kv_rank:]                                # (M, rope) shared over heads
    kvb = _mm(_dyt(kv_c, kv_dyt_ref[...]), wkvb_ref[...]) + bkvb_ref[...]

    # ---- RoPE (torch interleaved-complex convention), applied in-kernel.
    cos = cos_ref[...]
    sin = sin_ref[...]
    perm = perm_ref[...]                                  # pair-swap permutation

    def rope_rot(t):
        # out[2i]   = t[2i]*cos_i - t[2i+1]*sin_i
        # out[2i+1] = t[2i]*sin_i + t[2i+1]*cos_i
        return t * cos + _mm(t, perm) * sin

    k_pe = rope_rot(k_pe)
    mask = mask_ref[...]                                  # (M, M) batch block-diag

    qk_head = nope + rope_d
    outs = []
    for h in range(n_heads):                              # static small loop
        qh = q[:, h * qk_head:(h + 1) * qk_head]
        qn = qh[:, :nope]
        qp = rope_rot(qh[:, nope:])
        kvh = kvb[:, h * (nope + v_dim):(h + 1) * (nope + v_dim)]
        kn = kvh[:, :nope]
        vh = kvh[:, nope:]

        s = (_mm_nt(qn, kn) + _mm_nt(qp, k_pe)) * scale + mask   # (M, M)
        s = s - jnp.max(s, axis=-1, keepdims=True)
        p = jnp.exp(s)
        p = p * pl.reciprocal(jnp.sum(p, axis=-1, keepdims=True), approx=True)
        outs.append(_mm(p, vh))                           # (M, v_dim)

    o = outs[0] if n_heads == 1 else jnp.concatenate(outs, axis=-1)
    o_ref[...] = x + _mm(o, wo_ref[...]) + bo_ref[...]    # wo + residual


def _ffn_kernel(x_ref, ffn_dyt_ref, w1_ref, b1_ref, w3_ref, b3_ref,
                w2_ref, b2_ref, o_ref):
    """Fused: x = ffn_norm(x); x = x + w2(silu(w1 x) * w3 x)."""
    xn = _dyt(x_ref[...], ffn_dyt_ref[...])
    h1 = _mm(xn, w1_ref[...]) + b1_ref[...]
    h3 = _mm(xn, w3_ref[...]) + b3_ref[...]
    g = h1 * jax.nn.sigmoid(h1)                           # SiLU
    o_ref[...] = xn + _mm(g * h3, w2_ref[...]) + b2_ref[...]


# ----------------------------- kernel wrappers ------------------------------
def embed_pallas(x2, w, b):
    M, K = x2.shape
    N = w.shape[1]
    return pl.pallas_call(
        _embed_kernel,
        grid=(1,),
        in_specs=[_full_spec((M, K)), _full_spec((K, N)), _full_spec((1, N))],
        out_specs=_full_spec((M, N)),
        out_shape=jax.ShapeDtypeStruct((M, N), jnp.float32),
        compiler_params=pltpu.CompilerParams(dimension_semantics=("arbitrary",)),
    )(x2, w, b)


def mla_block_pallas(x, lp, cos, sin, perm, mask, args: ModelArgs, scale):
    assert args.q_lora_rank > 0  # TODO(synk): direct-wq (q_lora_rank == 0) path not implemented
    M, D = x.shape
    kernel = functools.partial(
        _mla_kernel,
        n_heads=args.n_heads,
        nope=args.qk_nope_head_dim,
        rope_d=args.qk_rope_head_dim,
        v_dim=args.v_head_dim,
        kv_rank=args.kv_lora_rank,
        scale=scale,
    )
    inputs = [
        x, lp["attn_norm"],
        lp["wq_a"][0], lp["wq_a"][1], lp["q_norm"], lp["wq_b"][0], lp["wq_b"][1],
        lp["wkv_a"][0], lp["wkv_a"][1], lp["kv_norm"], lp["wkv_b"][0], lp["wkv_b"][1],
        lp["wo"][0], lp["wo"][1],
        cos, sin, perm, mask,
    ]
    return pl.pallas_call(
        kernel,
        grid=(1,),
        in_specs=[_full_spec(a.shape) for a in inputs],
        out_specs=_full_spec((M, D)),
        out_shape=jax.ShapeDtypeStruct((M, D), jnp.float32),
        compiler_params=pltpu.CompilerParams(dimension_semantics=("arbitrary",)),
    )(*inputs)


def ffn_block_pallas(x, lp):
    M, D = x.shape
    inputs = [x, lp["ffn_norm"],
              lp["w1"][0], lp["w1"][1], lp["w3"][0], lp["w3"][1],
              lp["w2"][0], lp["w2"][1]]
    return pl.pallas_call(
        _ffn_kernel,
        grid=(1,),
        in_specs=[_full_spec(a.shape) for a in inputs],
        out_specs=_full_spec((M, D)),
        out_shape=jax.ShapeDtypeStruct((M, D), jnp.float32),
        compiler_params=pltpu.CompilerParams(dimension_semantics=("arbitrary",)),
    )(*inputs)


# ----------------------------- parameters ----------------------------------
def init_linear(key, in_f, out_f):
    """nn.Linear-style init; weight stored pre-transposed as (in, out)."""
    kw, kb = jax.random.split(key)
    bound = 1.0 / math.sqrt(in_f)
    w = jax.random.uniform(kw, (in_f, out_f), jnp.float32, -bound, bound)
    b = jax.random.uniform(kb, (1, out_f), jnp.float32, -bound, bound)
    return (w, b)


def init_dyt(num_features, alpha_init=0.5):
    """Stacked DyT params (3, C): [alpha (broadcast), gamma, beta]."""
    return jnp.stack([
        jnp.full((num_features,), alpha_init, jnp.float32),
        jnp.ones((num_features,), jnp.float32),
        jnp.zeros((num_features,), jnp.float32),
    ], axis=0)


def init_params(args: ModelArgs, key):
    qk_head = args.qk_nope_head_dim + args.qk_rope_head_dim
    keys = iter(jax.random.split(key, 4 + 8 * args.n_layers))
    params = {"embed": init_linear(next(keys), args.input_dim, args.dim),
              "layers": []}
    for _ in range(args.n_layers):
        lp = {
            "wq_a": init_linear(next(keys), args.dim, args.q_lora_rank),
            "q_norm": init_dyt(args.q_lora_rank),
            "wq_b": init_linear(next(keys), args.q_lora_rank, args.n_heads * qk_head),
            "wkv_a": init_linear(next(keys), args.dim,
                                 args.kv_lora_rank + args.qk_rope_head_dim),
            "kv_norm": init_dyt(args.kv_lora_rank),
            "wkv_b": init_linear(next(keys), args.kv_lora_rank,
                                 args.n_heads * (args.qk_nope_head_dim + args.v_head_dim)),
            "wo": init_linear(next(keys), args.n_heads * args.v_head_dim, args.dim),
            "attn_norm": init_dyt(args.dim),
            "ffn_norm": init_dyt(args.dim),
            "w1": init_linear(next(keys), args.dim, args.inter_dim),
            "w2": init_linear(next(keys), args.inter_dim, args.dim),
            "w3": init_linear(next(keys), args.dim, args.inter_dim),
        }
        params["layers"].append(lp)
    return params


# ----------------------------- rope / mask tables ---------------------------
def precompute_rope_tables(args: ModelArgs, start_pos, seqlen, bsz):
    """cos / sin tables expanded to the interleaved layout, tiled over batch,
    plus the pair-swap permutation matrix used for in-kernel rotation."""
    dim = args.qk_rope_head_dim
    base = args.rope_theta
    freqs = 1.0 / base ** (jnp.arange(0, dim, 2, dtype=jnp.float32) / dim)
    if args.max_seq_len > args.original_seq_len:
        def corr_dim(num_rot):
            return (dim * math.log(args.original_seq_len / (num_rot * 2 * math.pi))
                    / (2 * math.log(base)))
        low = max(math.floor(corr_dim(args.beta_fast)), 0)
        high = min(math.ceil(corr_dim(args.beta_slow)), dim - 1)
        if low == high:
            high = high + 0.001
        ramp = jnp.clip((jnp.arange(dim // 2, dtype=jnp.float32) - low) / (high - low),
                        0.0, 1.0)
        smooth = 1.0 - ramp
        freqs = freqs / args.rope_factor * (1.0 - smooth) + freqs * smooth
    t = jnp.arange(args.max_seq_len, dtype=jnp.float32)
    ang = jnp.outer(t, freqs)[start_pos:start_pos + seqlen]      # (S, dim//2)
    cos = jnp.cos(ang)
    sin = jnp.sin(ang)
    cos_full = jnp.repeat(cos, 2, axis=-1)                        # [c0,c0,c1,c1,...]
    sin_signed = jnp.stack([-sin, sin], axis=-1).reshape(seqlen, dim)  # [-s0,s0,...]
    # Rows of the flattened token slab are (b-major, s-minor): tile over batch.
    cos_full = jnp.tile(cos_full, (bsz, 1))
    sin_signed = jnp.tile(sin_signed, (bsz, 1))
    idx = jnp.arange(dim)
    perm = (jnp.bitwise_xor(idx[:, None], 1) == idx[None, :]).astype(jnp.float32)
    return cos_full, sin_signed, perm


def batch_block_mask(bsz, seqlen):
    """Additive mask so flattened (b*s) tokens only attend within their batch."""
    bidx = jnp.repeat(jnp.arange(bsz), seqlen)
    return jnp.where(bidx[:, None] == bidx[None, :], 0.0, -1e9).astype(jnp.float32)


# ----------------------------- model forward --------------------------------
def transformer_forward(params, tokens, args: ModelArgs, mask=None, start_pos: int = 0):
    # tokens: (B, S, input_dim) float features (embed is nn.Linear in the reference).
    assert mask is None  # TODO(synk): external additive attention-mask branch not wired in
    # TODO(synk): KV-cache / incremental decode (start_pos > 0 with history) not implemented;
    # this is the full-prefill 'naive' attn_impl path.
    B, S, _ = tokens.shape
    M = B * S

    h = embed_pallas(tokens.reshape(M, -1), *params["embed"])    # (M, dim)

    cos, sin, perm = precompute_rope_tables(args, start_pos, S, B)
    bmask = batch_block_mask(B, S)

    scale = (args.qk_nope_head_dim + args.qk_rope_head_dim) ** (-0.5)
    if args.max_seq_len > args.original_seq_len:
        m = 0.1 * args.mscale * math.log(args.rope_factor) + 1.0
        scale = scale * m * m

    for lp in params["layers"]:
        h = mla_block_pallas(h, lp, cos, sin, perm, bmask, args, scale)
        h = ffn_block_pallas(h, lp)
    return h.reshape(B, S, args.dim)


# ----------------------------- main -----------------------------------------
if __name__ == "__main__":
    args = ModelArgs()
    key = jax.random.PRNGKey(0)
    kp, kt = jax.random.split(key)
    params = init_params(args, kp)

    batch, seq = 2, 16
    tokens = jax.random.normal(kt, (batch, seq, args.input_dim), jnp.float32)

    fwd = jax.jit(lambda p, t: transformer_forward(p, t, args, mask=None, start_pos=0))
    out = jax.block_until_ready(fwd(params, tokens))

    assert out.shape == (batch, seq, args.dim), out.shape
    assert out.dtype == jnp.float32
    assert bool(jnp.all(jnp.isfinite(out)))
    print("KERNEL_OK")
</pallas_src>

<mosaic_0001>
module attributes {stable_mosaic.version = 11 : i64} {
  func.func @_embed_kernel(%arg0: i32, %arg1: memref<32x10xf32, #tpu.memory_space<vmem>>, %arg2: memref<10x128xf32, #tpu.memory_space<vmem>>, %arg3: memref<1x128xf32, #tpu.memory_space<vmem>>, %arg4: memref<32x128xf32, #tpu.memory_space<vmem>>) attributes {dimension_semantics = [#tpu.dimension_semantics<arbitrary>], iteration_bounds = array<i64: 1>, scalar_prefetch = 0 : i64, scratch_operands = 0 : i64, tpu.core_type = #tpu.core_type<tc>, window_params = [{pipeline_mode = #tpu.pipeline_mode<synchronous>, transform_indices = @transform_0, window_bounds = array<i64: 32, 10>}, {pipeline_mode = #tpu.pipeline_mode<synchronous>, transform_indices = @transform_1, window_bounds = array<i64: 10, 128>}, {pipeline_mode = #tpu.pipeline_mode<synchronous>, transform_indices = @transform_2, window_bounds = array<i64: 1, 128>}, {pipeline_mode = #tpu.pipeline_mode<synchronous>, transform_indices = @transform_3, window_bounds = array<i64: 32, 128>}]} {
    %c0 = arith.constant 0 : index
    %c0_0 = arith.constant 0 : index
    %0 = vector.load %arg1[%c0, %c0_0] : memref<32x10xf32, #tpu.memory_space<vmem>>, vector<32x10xf32>
    %c0_1 = arith.constant 0 : index
    %c0_2 = arith.constant 0 : index
    %1 = vector.load %arg2[%c0_1, %c0_2] : memref<10x128xf32, #tpu.memory_space<vmem>>, vector<10x128xf32>
    %cst = arith.constant dense<0.000000e+00> : vector<32x128xf32>
    %2 = tpu.matmul %0, %1, %cst {dimension_numbers = #tpu.dot_dimension_numbers<[1], [0], [0], [1], [0, 0, 1, 1], [], []>} : vector<32x10xf32>, vector<10x128xf32>, vector<32x128xf32> -> vector<32x128xf32>
    %c0_3 = arith.constant 0 : index
    %c0_4 = arith.constant 0 : index
    %3 = vector.load %arg3[%c0_3, %c0_4] : memref<1x128xf32, #tpu.memory_space<vmem>>, vector<1x128xf32>
    %4 = vector.broadcast %3 : vector<1x128xf32> to vector<32x128xf32>
    %5 = arith.addf %2, %4 : vector<32x128xf32>
    %c0_5 = arith.constant 0 : index
    %c0_6 = arith.constant 0 : index
    %6 = vector.load %arg4[%c0_5, %c0_6] : memref<32x128xf32, #tpu.memory_space<vmem>>, vector<32x128xf32>
    tpu.vector_store %arg4[%c0_5, %c0_6], %5 {strides = array<i32>} : memref<32x128xf32, #tpu.memory_space<vmem>>, vector<32x128xf32>,
    return
  }
  func.func @transform_0(%arg0: i32) -> (i32, i32) {
    %c0_i32 = arith.constant 0 : i32
    %c0_i32_0 = arith.constant 0 : i32
    %c0_i32_1 = arith.constant 0 : i32
    return %c0_i32, %c0_i32_0 : i32, i32
  }
  func.func @transform_1(%arg0: i32) -> (i32, i32) {
    %c0_i32 = arith.constant 0 : i32
    %c0_i32_0 = arith.constant 0 : i32
    %c0_i32_1 = arith.constant 0 : i32
    return %c0_i32, %c0_i32_0 : i32, i32
  }
  func.func @transform_2(%arg0: i32) -> (i32, i32) {
    %c0_i32 = arith.constant 0 : i32
    %c0_i32_0 = arith.constant 0 : i32
    %c0_i32_1 = arith.constant 0 : i32
    return %c0_i32, %c0_i32_0 : i32, i32
  }
  func.func @transform_3(%arg0: i32) -> (i32, i32) {
    %c0_i32 = arith.constant 0 : i32
    %c0_i32_0 = arith.constant 0 : i32
    %c0_i32_1 = arith.constant 0 : i32
    return %c0_i32, %c0_i32_0 : i32, i32
  }
}

module attributes {stable_mosaic.version = 11 : i64} {
  func.func @_ffn_kernel(%arg0: i32, %arg1: memref<32x128xf32, #tpu.memory_space<vmem>>, %arg2: memref<3x128xf32, #tpu.memory_space<vmem>>, %arg3: memref<128x256xf32, #tpu.memory_space<vmem>>, %arg4: memref<1x256xf32, #tpu.memory_space<vmem>>, %arg5: memref<128x256xf32, #tpu.memory_space<vmem>>, %arg6: memref<1x256xf32, #tpu.memory_space<vmem>>, %arg7: memref<256x128xf32, #tpu.memory_space<vmem>>, %arg8: memref<1x128xf32, #tpu.memory_space<vmem>>, %arg9: memref<32x128xf32, #tpu.memory_space<vmem>>) attributes {dimension_semantics = [#tpu.dimension_semantics<arbitrary>], iteration_bounds = array<i64: 1>, scalar_prefetch = 0 : i64, scratch_operands = 0 : i64, tpu.core_type = #tpu.core_type<tc>, window_params = [{pipeline_mode = #tpu.pipeline_mode<synchronous>, transform_indices = @transform_0, window_bounds = array<i64: 32, 128>}, {pipeline_mode = #tpu.pipeline_mode<synchronous>, transform_indices = @transform_1, window_bounds = array<i64: 3, 128>}, {pipeline_mode = #tpu.pipeline_mode<synchronous>, transform_indices = @transform_2, window_bounds = array<i64: 128, 256>}, {pipeline_mode = #tpu.pipeline_mode<synchronous>, transform_indices = @transform_3, window_bounds = array<i64: 1, 256>}, {pipeline_mode = #tpu.pipeline_mode<synchronous>, transform_indices = @transform_4, window_bounds = array<i64: 128, 256>}, {pipeline_mode = #tpu.pipeline_mode<synchronous>, transform_indices = @transform_5, window_bounds = array<i64: 1, 256>}, {pipeline_mode = #tpu.pipeline_mode<synchronous>, transform_indices = @transform_6, window_bounds = array<i64: 256, 128>}, {pipeline_mode = #tpu.pipeline_mode<synchronous>, transform_indices = @transform_7, window_bounds = array<i64: 1, 128>}, {pipeline_mode = #tpu.pipeline_mode<synchronous>, transform_indices = @transform_8, window_bounds = array<i64: 32, 128>}]} {
    %c0 = arith.constant 0 : index
    %c0_0 = arith.constant 0 : index
    %0 = vector.load %arg1[%c0, %c0_0] : memref<32x128xf32, #tpu.memory_space<vmem>>, vector<32x128xf32>
    %c0_1 = arith.constant 0 : index
    %c0_2 = arith.constant 0 : index
    %1 = vector.load %arg2[%c0_1, %c0_2] : memref<3x128xf32, #tpu.memory_space<vmem>>, vector<3x128xf32>
    %2 = vector.extract_strided_slice %1 {offsets = [0, 0], sizes = [1, 128], strides = [1, 1]} : vector<3x128xf32> to vector<1x128xf32>
    %3 = vector.broadcast %2 : vector<1x128xf32> to vector<32x128xf32>
    %4 = arith.mulf %0, %3 : vector<32x128xf32>
    %5 = math.tanh %4 : vector<32x128xf32>
    %6 = vector.extract_strided_slice %1 {offsets = [1, 0], sizes = [1, 128], strides = [1, 1]} : vector<3x128xf32> to vector<1x128xf32>
    %7 = vector.broadcast %6 : vector<1x128xf32> to vector<32x128xf32>
    %8 = arith.mulf %5, %7 : vector<32x128xf32>
    %9 = vector.extract_strided_slice %1 {offsets = [2, 0], sizes = [1, 128], strides = [1, 1]} : vector<3x128xf32> to vector<1x128xf32>
    %10 = vector.broadcast %9 : vector<1x128xf32> to vector<32x128xf32>
    %11 = arith.addf %8, %10 : vector<32x128xf32>
    %c0_3 = arith.constant 0 : index
    %c0_4 = arith.constant 0 : index
    %12 = vector.load %arg3[%c0_3, %c0_4] : memref<128x256xf32, #tpu.memory_space<vmem>>, vector<128x256xf32>
    %cst = arith.constant dense<0.000000e+00> : vector<32x256xf32>
    %13 = tpu.matmul %11, %12, %cst {dimension_numbers = #tpu.dot_dimension_numbers<[1], [0], [0], [1], [0, 0, 1, 1], [], []>} : vector<32x128xf32>, vector<128x256xf32>, vector<32x256xf32> -> vector<32x256xf32>
    %c0_5 = arith.constant 0 : index
    %c0_6 = arith.constant 0 : index
    %14 = vector.load %arg4[%c0_5, %c0_6] : memref<1x256xf32, #tpu.memory_space<vmem>>, vector<1x256xf32>
    %15 = vector.broadcast %14 : vector<1x256xf32> to vector<32x256xf32>
    %16 = arith.addf %13, %15 : vector<32x256xf32>
    %c0_7 = arith.constant 0 : index
    %c0_8 = arith.constant 0 : index
    %17 = vector.load %arg5[%c0_7, %c0_8] : memref<128x256xf32, #tpu.memory_space<vmem>>, vector<128x256xf32>
    %cst_9 = arith.constant dense<0.000000e+00> : vector<32x256xf32>
    %18 = tpu.matmul %11, %17, %cst_9 {dimension_numbers = #tpu.dot_dimension_numbers<[1], [0], [0], [1], [0, 0, 1, 1], [], []>} : vector<32x128xf32>, vector<128x256xf32>, vector<32x256xf32> -> vector<32x256xf32>
    %c0_10 = arith.constant 0 : index
    %c0_11 = arith.constant 0 : index
    %19 = vector.load %arg6[%c0_10, %c0_11] : memref<1x256xf32, #tpu.memory_space<vmem>>, vector<1x256xf32>
    %20 = vector.broadcast %19 : vector<1x256xf32> to vector<32x256xf32>
    %21 = arith.addf %18, %20 : vector<32x256xf32>
    %22 = arith.negf %16 : vector<32x256xf32>
    %23 = math.exp %22 : vector<32x256xf32>
    %cst_12 = arith.constant 1.000000e+00 : f32
    %24 = vector.broadcast %cst_12 : f32 to vector<32x256xf32>
    %25 = arith.addf %24, %23 : vector<32x256xf32>
    %26 = arith.divf %24, %25 : vector<32x256xf32>
    %27 = arith.mulf %16, %26 : vector<32x256xf32>
    %28 = arith.mulf %27, %21 : vector<32x256xf32>
    %c0_13 = arith.constant 0 : index
    %c0_14 = arith.constant 0 : index
    %29 = vector.load %arg7[%c0_13, %c0_14] : memref<256x128xf32, #tpu.memory_space<vmem>>, vector<256x128xf32>
    %cst_15 = arith.constant dense<0.000000e+00> : vector<32x128xf32>
    %30 = tpu.matmul %28, %29, %cst_15 {dimension_numbers = #tpu.dot_dimension_numbers<[1], [0], [0], [1], [0, 0, 1, 1], [], []>} : vector<32x256xf32>, vector<256x128xf32>, vector<32x128xf32> -> vector<32x128xf32>
    %31 = arith.addf %11, %30 : vector<32x128xf32>
    %c0_16 = arith.constant 0 : index
    %c0_17 = arith.constant 0 : index
    %32 = vector.load %arg8[%c0_16, %c0_17] : memref<1x128xf32, #tpu.memory_space<vmem>>, vector<1x128xf32>
    %33 = vector.broadcast %32 : vector<1x128xf32> to vector<32x128xf32>
    %34 = arith.addf %31, %33 : vector<32x128xf32>
    %c0_18 = arith.constant 0 : index
    %c0_19 = arith.constant 0 : index
    %35 = vector.load %arg9[%c0_18, %c0_19] : memref<32x128xf32, #tpu.memory_space<vmem>>, vector<32x128xf32>
    tpu.vector_store %arg9[%c0_18, %c0_19], %34 {strides = array<i32>} : memref<32x128xf32, #tpu.memory_space<vmem>>, vector<32x128xf32>,
    return
  }
  func.func @transform_0(%arg0: i32) -> (i32, i32) {
    %c0_i32 = arith.constant 0 : i32
    %c0_i32_0 = arith.constant 0 : i32
    %c0_i32_1 = arith.constant 0 : i32
    return %c0_i32, %c0_i32_0 : i32, i32
  }
  func.func @transform_1(%arg0: i32) -> (i32, i32) {
    %c0_i32 = arith.constant 0 : i32
    %c0_i32_0 = arith.constant 0 : i32
    %c0_i32_1 = arith.constant 0 : i32
    return %c0_i32, %c0_i32_0 : i32, i32
  }
  func.func @transform_2(%arg0: i32) -> (i32, i32) {
    %c0_i32 = arith.constant 0 : i32
    %c0_i32_0 = arith.constant 0 : i32
    %c0_i32_1 = arith.constant 0 : i32
    return %c0_i32, %c0_i32_0 : i32, i32
  }
  func.func @transform_3(%arg0: i32) -> (i32, i32) {
    %c0_i32 = arith.constant 0 : i32
    %c0_i32_0 = arith.constant 0 : i32
    %c0_i32_1 = arith.constant 0 : i32
    return %c0_i32, %c0_i32_0 : i32, i32
  }
  func.func @transform_4(%arg0: i32) -> (i32, i32) {
    %c0_i32 = arith.constant 0 : i32
    %c0_i32_0 = arith.constant 0 : i32
    %c0_i32_1 = arith.constant 0 : i32
    return %c0_i32, %c0_i32_0 : i32, i32
  }
  func.func @transform_5(%arg0: i32) -> (i32, i32) {
    %c0_i32 = arith.constant 0 : i32
    %c0_i32_0 = arith.constant 0 : i32
    %c0_i32_1 = arith.constant 0 : i32
    return %c0_i32, %c0_i32_0 : i32, i32
  }
  func.func @transform_6(%arg0: i32) -> (i32, i32) {
    %c0_i32 = arith.constant 0 : i32
    %c0_i32_0 = arith.constant 0 : i32
    %c0_i32_1 = arith.constant 0 : i32
    return %c0_i32, %c0_i32_0 : i32, i32
  }
  func.func @transform_7(%arg0: i32) -> (i32, i32) {
    %c0_i32 = arith.constant 0 : i32
    %c0_i32_0 = arith.constant 0 : i32
    %c0_i32_1 = arith.constant 0 : i32
    return %c0_i32, %c0_i32_0 : i32, i32
  }
  func.func @transform_8(%arg0: i32) -> (i32, i32) {
    %c0_i32 = arith.constant 0 : i32
    %c0_i32_0 = arith.constant 0 : i32
    %c0_i32_1 = arith.constant 0 : i32
    return %c0_i32, %c0_i32_0 : i32, i32
  }
}

module attributes {stable_mosaic.version = 11 : i64} {
  func.func @_mla_kernel(%arg0: i32, %arg1: memref<32x128xf32, #tpu.memory_space<vmem>>, %arg2: memref<3x128xf32, #tpu.memory_space<vmem>>, %arg3: memref<128x64xf32, #tpu.memory_space<vmem>>, %arg4: memref<1x64xf32, #tpu.memory_space<vmem>>, %arg5: memref<3x64xf32, #tpu.memory_space<vmem>>, %arg6: memref<64x128xf32, #tpu.memory_space<vmem>>, %arg7: memref<1x128xf32, #tpu.memory_space<vmem>>, %arg8: memref<128x128xf32, #tpu.memory_space<vmem>>, %arg9: memref<1x128xf32, #tpu.memory_space<vmem>>, %arg10: memref<3x64xf32, #tpu.memory_space<vmem>>, %arg11: memref<64x192xf32, #tpu.memory_space<vmem>>, %arg12: memref<1x192xf32, #tpu.memory_space<vmem>>, %arg13: memref<128x128xf32, #tpu.memory_space<vmem>>, %arg14: memref<1x128xf32, #tpu.memory_space<vmem>>, %arg15: memref<32x64xf32, #tpu.memory_space<vmem>>, %arg16: memref<32x64xf32, #tpu.memory_space<vmem>>, %arg17: memref<64x64xf32, #tpu.memory_space<vmem>>, %arg18: memref<32x32xf32, #tpu.memory_space<vmem>>, %arg19: memref<32x128xf32, #tpu.memory_space<vmem>>) attributes {dimension_semantics = [#tpu.dimension_semantics<arbitrary>], iteration_bounds = array<i64: 1>, scalar_prefetch = 0 : i64, scratch_operands = 0 : i64, tpu.core_type = #tpu.core_type<tc>, window_params = [{pipeline_mode = #tpu.pipeline_mode<synchronous>, transform_indices = @transform_0, window_bounds = array<i64: 32, 128>}, {pipeline_mode = #tpu.pipeline_mode<synchronous>, transform_indices = @transform_1, window_bounds = array<i64: 3, 128>}, {pipeline_mode = #tpu.pipeline_mode<synchronous>, transform_indices = @transform_2, window_bounds = array<i64: 128, 64>}, {pipeline_mode = #tpu.pipeline_mode<synchronous>, transform_indices = @transform_3, window_bounds = array<i64: 1, 64>}, {pipeline_mode = #tpu.pipeline_mode<synchronous>, transform_indices = @transform_4, window_bounds = array<i64: 3, 64>}, {pipeline_mode = #tpu.pipeline_mode<synchronous>, transform_indices = @transform_5, window_bounds = array<i64: 64, 128>}, {pipeline_mode = #tpu.pipeline_mode<synchronous>, transform_indices = @transform_6, window_bounds = array<i64: 1, 128>}, {pipeline_mode = #tpu.pipeline_mode<synchronous>, transform_indices = @transform_7, window_bounds = array<i64: 128, 128>}, {pipeline_mode = #tpu.pipeline_mode<synchronous>, transform_indices = @transform_8, window_bounds = array<i64: 1, 128>}, {pipeline_mode = #tpu.pipeline_mode<synchronous>, transform_indices = @transform_9, window_bounds = array<i64: 3, 64>}, {pipeline_mode = #tpu.pipeline_mode<synchronous>, transform_indices = @transform_10, window_bounds = array<i64: 64, 192>}, {pipeline_mode = #tpu.pipeline_mode<synchronous>, transform_indices = @transform_11, window_bounds = array<i64: 1, 192>}, {pipeline_mode = #tpu.pipeline_mode<synchronous>, transform_indices = @transform_12, window_bounds = array<i64: 128, 128>}, {pipeline_mode = #tpu.pipeline_mode<synchronous>, transform_indices = @transform_13, window_bounds = array<i64: 1, 128>}, {pipeline_mode = #tpu.pipeline_mode<synchronous>, transform_indices = @transform_14, window_bounds = array<i64: 32, 64>}, {pipeline_mode = #tpu.pipeline_mode<synchronous>, transform_indices = @transform_15, window_bounds = array<i64: 32, 64>}, {pipeline_mode = #tpu.pipeline_mode<synchronous>, transform_indices = @transform_16, window_bounds = array<i64: 64, 64>}, {pipeline_mode = #tpu.pipeline_mode<synchronous>, transform_indices = @transform_17, window_bounds = array<i64: 32, 32>}, {pipeline_mode = #tpu.pipeline_mode<synchronous>, transform_indices = @transform_18, window_bounds = array<i64: 32, 128>}]} {
    %c0 = arith.constant 0 : index
    %c0_0 = arith.constant 0 : index
    %0 = vector.load %arg1[%c0, %c0_0] : memref<32x128xf32, #tpu.memory_space<vmem>>, vector<32x128xf32>
    %c0_1 = arith.constant 0 : index
    %c0_2 = arith.constant 0 : index
    %1 = vector.load %arg2[%c0_1, %c0_2] : memref<3x128xf32, #tpu.memory_space<vmem>>, vector<3x128xf32>
    %2 = vector.extract_strided_slice %1 {offsets = [0, 0], sizes = [1, 128], strides = [1, 1]} : vector<3x128xf32> to vector<1x128xf32>
    %3 = vector.broadcast %2 : vector<1x128xf32> to vector<32x128xf32>
    %4 = arith.mulf %0, %3 : vector<32x128xf32>
    %5 = math.tanh %4 : vector<32x128xf32>
    %6 = vector.extract_strided_slice %1 {offsets = [1, 0], sizes = [1, 128], strides = [1, 1]} : vector<3x128xf32> to vector<1x128xf32>
    %7 = vector.broadcast %6 : vector<1x128xf32> to vector<32x128xf32>
    %8 = arith.mulf %5, %7 : vector<32x128xf32>
    %9 = vector.extract_strided_slice %1 {offsets = [2, 0], sizes = [1, 128], strides = [1, 1]} : vector<3x128xf32> to vector<1x128xf32>
    %10 = vector.broadcast %9 : vector<1x128xf32> to vector<32x128xf32>
    %11 = arith.addf %8, %10 : vector<32x128xf32>
    %c0_3 = arith.constant 0 : index
    %c0_4 = arith.constant 0 : index
    %12 = vector.load %arg3[%c0_3, %c0_4] : memref<128x64xf32, #tpu.memory_space<vmem>>, vector<128x64xf32>
    %cst = arith.constant dense<0.000000e+00> : vector<32x64xf32>
    %13 = tpu.matmul %11, %12, %cst {dimension_numbers = #tpu.dot_dimension_numbers<[1], [0], [0], [1], [0, 0, 1, 1], [], []>} : vector<32x128xf32>, vector<128x64xf32>, vector<32x64xf32> -> vector<32x64xf32>
    %c0_5 = arith.constant 0 : index
    %c0_6 = arith.constant 0 : index
    %14 = vector.load %arg4[%c0_5, %c0_6] : memref<1x64xf32, #tpu.memory_space<vmem>>, vector<1x64xf32>
    %15 = vector.broadcast %14 : vector<1x64xf32> to vector<32x64xf32>
    %16 = arith.addf %13, %15 : vector<32x64xf32>
    %c0_7 = arith.constant 0 : index
    %c0_8 = arith.constant 0 : index
    %17 = vector.load %arg5[%c0_7, %c0_8] : memref<3x64xf32, #tpu.memory_space<vmem>>, vector<3x64xf32>
    %18 = vector.extract_strided_slice %17 {offsets = [0, 0], sizes = [1, 64], strides = [1, 1]} : vector<3x64xf32> to vector<1x64xf32>
    %19 = vector.broadcast %18 : vector<1x64xf32> to vector<32x64xf32>
    %20 = arith.mulf %16, %19 : vector<32x64xf32>
    %21 = math.tanh %20 : vector<32x64xf32>
    %22 = vector.extract_strided_slice %17 {offsets = [1, 0], sizes = [1, 64], strides = [1, 1]} : vector<3x64xf32> to vector<1x64xf32>
    %23 = vector.broadcast %22 : vector<1x64xf32> to vector<32x64xf32>
    %24 = arith.mulf %21, %23 : vector<32x64xf32>
    %25 = vector.extract_strided_slice %17 {offsets = [2, 0], sizes = [1, 64], strides = [1, 1]} : vector<3x64xf32> to vector<1x64xf32>
    %26 = vector.broadcast %25 : vector<1x64xf32> to vector<32x64xf32>
    %27 = arith.addf %24, %26 : vector<32x64xf32>
    %c0_9 = arith.constant 0 : index
    %c0_10 = arith.constant 0 : index
    %28 = vector.load %arg6[%c0_9, %c0_10] : memref<64x128xf32, #tpu.memory_space<vmem>>, vector<64x128xf32>
    %cst_11 = arith.constant dense<0.000000e+00> : vector<32x128xf32>
    %29 = tpu.matmul %27, %28, %cst_11 {dimension_numbers = #tpu.dot_dimension_numbers<[1], [0], [0], [1], [0, 0, 1, 1], [], []>} : vector<32x64xf32>, vector<64x128xf32>, vector<32x128xf32> -> vector<32x128xf32>
    %c0_12 = arith.constant 0 : index
    %c0_13 = arith.constant 0 : index
    %30 = vector.load %arg7[%c0_12, %c0_13] : memref<1x128xf32, #tpu.memory_space<vmem>>, vector<1x128xf32>
    %31 = vector.broadcast %30 : vector<1x128xf32> to vector<32x128xf32>
    %32 = arith.addf %29, %31 : vector<32x128xf32>
    %c0_14 = arith.constant 0 : index
    %c0_15 = arith.constant 0 : index
    %33 = vector.load %arg8[%c0_14, %c0_15] : memref<128x128xf32, #tpu.memory_space<vmem>>, vector<128x128xf32>
    %cst_16 = arith.constant dense<0.000000e+00> : vector<32x128xf32>
    %34 = tpu.matmul %11, %33, %cst_16 {dimension_numbers = #tpu.dot_dimension_numbers<[1], [0], [0], [1], [0, 0, 1, 1], [], []>} : vector<32x128xf32>, vector<128x128xf32>, vector<32x128xf32> -> vector<32x128xf32>
    %c0_17 = arith.constant 0 : index
    %c0_18 = arith.constant 0 : index
    %35 = vector.load %arg9[%c0_17, %c0_18] : memref<1x128xf32, #tpu.memory_space<vmem>>, vector<1x128xf32>
    %36 = vector.broadcast %35 : vector<1x128xf32> to vector<32x128xf32>
    %37 = arith.addf %34, %36 : vector<32x128xf32>
    %38 = vector.extract_strided_slice %37 {offsets = [0, 0], sizes = [32, 64], strides = [1, 1]} : vector<32x128xf32> to vector<32x64xf32>
    %39 = vector.extract_strided_slice %37 {offsets = [0, 64], sizes = [32, 64], strides = [1, 1]} : vector<32x128xf32> to vector<32x64xf32>
    %c0_19 = arith.constant 0 : index
    %c0_20 = arith.constant 0 : index
    %40 = vector.load %arg10[%c0_19, %c0_20] : memref<3x64xf32, #tpu.memory_space<vmem>>, vector<3x64xf32>
    %41 = vector.extract_strided_slice %40 {offsets = [0, 0], sizes = [1, 64], strides = [1, 1]} : vector<3x64xf32> to vector<1x64xf32>
    %42 = vector.broadcast %41 : vector<1x64xf32> to vector<32x64xf32>
    %43 = arith.mulf %38, %42 : vector<32x64xf32>
    %44 = math.tanh %43 : vector<32x64xf32>
    %45 = vector.extract_strided_slice %40 {offsets = [1, 0], sizes = [1, 64], strides = [1, 1]} : vector<3x64xf32> to vector<1x64xf32>
    %46 = vector.broadcast %45 : vector<1x64xf32> to vector<32x64xf32>
    %47 = arith.mulf %44, %46 : vector<32x64xf32>
    %48 = vector.extract_strided_slice %40 {offsets = [2, 0], sizes = [1, 64], strides = [1, 1]} : vector<3x64xf32> to vector<1x64xf32>
    %49 = vector.broadcast %48 : vector<1x64xf32> to vector<32x64xf32>
    %50 = arith.addf %47, %49 : vector<32x64xf32>
    %c0_21 = arith.constant 0 : index
    %c0_22 = arith.constant 0 : index
    %51 = vector.load %arg11[%c0_21, %c0_22] : memref<64x192xf32, #tpu.memory_space<vmem>>, vector<64x192xf32>
    %cst_23 = arith.constant dense<0.000000e+00> : vector<32x192xf32>
    %52 = tpu.matmul %50, %51, %cst_23 {dimension_numbers = #tpu.dot_dimension_numbers<[1], [0], [0], [1], [0, 0, 1, 1], [], []>} : vector<32x64xf32>, vector<64x192xf32>, vector<32x192xf32> -> vector<32x192xf32>
    %c0_24 = arith.constant 0 : index
    %c0_25 = arith.constant 0 : index
    %53 = vector.load %arg12[%c0_24, %c0_25] : memref<1x192xf32, #tpu.memory_space<vmem>>, vector<1x192xf32>
    %54 = vector.broadcast %53 : vector<1x192xf32> to vector<32x192xf32>
    %55 = arith.addf %52, %54 : vector<32x192xf32>
    %c0_26 = arith.constant 0 : index
    %c0_27 = arith.constant 0 : index
    %56 = vector.load %arg15[%c0_26, %c0_27] : memref<32x64xf32, #tpu.memory_space<vmem>>, vector<32x64xf32>
    %c0_28 = arith.constant 0 : index
    %c0_29 = arith.constant 0 : index
    %57 = vector.load %arg16[%c0_28, %c0_29] : memref<32x64xf32, #tpu.memory_space<vmem>>, vector<32x64xf32>
    %c0_30 = arith.constant 0 : index
    %c0_31 = arith.constant 0 : index
    %58 = vector.load %arg17[%c0_30, %c0_31] : memref<64x64xf32, #tpu.memory_space<vmem>>, vector<64x64xf32>
    %59 = arith.mulf %39, %56 : vector<32x64xf32>
    %cst_32 = arith.constant dense<0.000000e+00> : vector<32x64xf32>
    %60 = tpu.matmul %39, %58, %cst_32 {dimension_numbers = #tpu.dot_dimension_numbers<[1], [0], [0], [1], [0, 0, 1, 1], [], []>} : vector<32x64xf32>, vector<64x64xf32>, vector<32x64xf32> -> vector<32x64xf32>
    %61 = arith.mulf %60, %57 : vector<32x64xf32>
    %62 = arith.addf %59, %61 : vector<32x64xf32>
    %c0_33 = arith.constant 0 : index
    %c0_34 = arith.constant 0 : index
    %63 = vector.load %arg18[%c0_33, %c0_34] : memref<32x32xf32, #tpu.memory_space<vmem>>, vector<32x32xf32>
    %64 = vector.extract_strided_slice %32 {offsets = [0, 0], sizes = [32, 64], strides = [1, 1]} : vector<32x128xf32> to vector<32x64xf32>
    %65 = vector.extract_strided_slice %32 {offsets = [0, 64], sizes = [32, 64], strides = [1, 1]} : vector<32x128xf32> to vector<32x64xf32>
    %66 = arith.mulf %65, %56 : vector<32x64xf32>
    %cst_35 = arith.constant dense<0.000000e+00> : vector<32x64xf32>
    %67 = tpu.matmul %65, %58, %cst_35 {dimension_numbers = #tpu.dot_dimension_numbers<[1], [0], [0], [1], [0, 0, 1, 1], [], []>} : vector<32x64xf32>, vector<64x64xf32>, vector<32x64xf32> -> vector<32x64xf32>
    %68 = arith.mulf %67, %57 : vector<32x64xf32>
    %69 = arith.addf %66, %68 : vector<32x64xf32>
    %70 = vector.extract_strided_slice %55 {offsets = [0, 0], sizes = [32, 64], strides = [1, 1]} : vector<32x192xf32> to vector<32x64xf32>
    %71 = vector.extract_strided_slice %55 {offsets = [0, 64], sizes = [32, 128], strides = [1, 1]} : vector<32x192xf32> to vector<32x128xf32>
    %cst_36 = arith.constant dense<0.000000e+00> : vector<32x32xf32>
    %72 = tpu.matmul %64, %70, %cst_36 {dimension_numbers = #tpu.dot_dimension_numbers<[1], [1], [0], [0], [0, 0, 1, 0], [], []>} : vector<32x64xf32>, vector<32x64xf32>, vector<32x32xf32> -> vector<32x32xf32>
    %cst_37 = arith.constant dense<0.000000e+00> : vector<32x32xf32>
    %73 = tpu.matmul %69, %62, %cst_37 {dimension_numbers = #tpu.dot_dimension_numbers<[1], [1], [0], [0], [0, 0, 1, 0], [], []>} : vector<32x64xf32>, vector<32x64xf32>, vector<32x32xf32> -> vector<32x32xf32>
    %74 = arith.addf %72, %73 : vector<32x32xf32>
    %cst_38 = arith.constant 0.0883883461 : f32
    %75 = vector.broadcast %cst_38 : f32 to vector<32x32xf32>
    %76 = arith.mulf %74, %75 : vector<32x32xf32>
    %77 = arith.addf %76, %63 : vector<32x32xf32>
    %cst_39 = arith.constant dense<0xFF800000> : vector<32xf32>
    %78 = vector.multi_reduction <maximumf>, %77, %cst_39 [1] : vector<32x32xf32> to vector<32xf32>
    %79 = vector.shape_cast %78 : vector<32xf32> to vector<32x1xf32>
    %80 = vector.broadcast %79 : vector<32x1xf32> to vector<32x32xf32>
    %81 = arith.subf %77, %80 : vector<32x32xf32>
    %82 = math.exp %81 : vector<32x32xf32>
    %cst_40 = arith.constant dense<0.000000e+00> : vector<32xf32>
    %83 = vector.multi_reduction <add>, %82, %cst_40 [1] : vector<32x32xf32> to vector<32xf32>
    %84 = vector.shape_cast %83 : vector<32xf32> to vector<32x1xf32>
    %85 = tpu.reciprocal %84 {approx = true} : vector<32x1xf32> -> vector<32x1xf32>
    %86 = vector.broadcast %85 : vector<32x1xf32> to vector<32x32xf32>
    %87 = arith.mulf %82, %86 : vector<32x32xf32>
    %cst_41 = arith.constant dense<0.000000e+00> : vector<32x128xf32>
    %88 = tpu.matmul %87, %71, %cst_41 {dimension_numbers = #tpu.dot_dimension_numbers<[1], [0], [0], [1], [0, 0, 1, 1], [], []>} : vector<32x32xf32>, vector<32x128xf32>, vector<32x128xf32> -> vector<32x128xf32>
    %c0_42 = arith.constant 0 : index
    %c0_43 = arith.constant 0 : index
    %89 = vector.load %arg13[%c0_42, %c0_43] : memref<128x128xf32, #tpu.memory_space<vmem>>, vector<128x128xf32>
    %cst_44 = arith.constant dense<0.000000e+00> : vector<32x128xf32>
    %90 = tpu.matmul %88, %89, %cst_44 {dimension_numbers = #tpu.dot_dimension_numbers<[1], [0], [0], [1], [0, 0, 1, 1], [], []>} : vector<32x128xf32>, vector<128x128xf32>, vector<32x128xf32> -> vector<32x128xf32>
    %91 = arith.addf %0, %90 : vector<32x128xf32>
    %c0_45 = arith.constant 0 : index
    %c0_46 = arith.constant 0 : index
    %92 = vector.load %arg14[%c0_45, %c0_46] : memref<1x128xf32, #tpu.memory_space<vmem>>, vector<1x128xf32>
    %93 = vector.broadcast %92 : vector<1x128xf32> to vector<32x128xf32>
    %94 = arith.addf %91, %93 : vector<32x128xf32>
    %c0_47 = arith.constant 0 : index
    %c0_48 = arith.constant 0 : index
    %95 = vector.load %arg19[%c0_47, %c0_48] : memref<32x128xf32, #tpu.memory_space<vmem>>, vector<32x128xf32>
    tpu.vector_store %arg19[%c0_47, %c0_48], %94 {strides = array<i32>} : memref<32x128xf32, #tpu.memory_space<vmem>>, vector<32x128xf32>,
    return
  }
  func.func @transform_0(%arg0: i32) -> (i32, i32) {
    %c0_i32 = arith.constant 0 : i32
    %c0_i32_0 = arith.constant 0 : i32
    %c0_i32_1 = arith.constant 0 : i32
    return %c0_i32, %c0_i32_0 : i32, i32
  }
  func.func @transform_1(%arg0: i32) -> (i32, i32) {
    %c0_i32 = arith.constant 0 : i32
    %c0_i32_0 = arith.constant 0 : i32
    %c0_i32_1 = arith.constant 0 : i32
    return %c0_i32, %c0_i32_0 : i32, i32
  }
  func.func @transform_2(%arg0: i32) -> (i32, i32) {
    %c0_i32 = arith.constant 0 : i32
    %c0_i32_0 = arith.constant 0 : i32
    %c0_i32_1 = arith.constant 0 : i32
    return %c0_i32, %c0_i32_0 : i32, i32
  }
  func.func @transform_3(%arg0: i32) -> (i32, i32) {
    %c0_i32 = arith.constant 0 : i32
    %c0_i32_0 = arith.constant 0 : i32
    %c0_i32_1 = arith.constant 0 : i32
    return %c0_i32, %c0_i32_0 : i32, i32
  }
  func.func @transform_4(%arg0: i32) -> (i32, i32) {
    %c0_i32 = arith.constant 0 : i32
    %c0_i32_0 = arith.constant 0 : i32
    %c0_i32_1 = arith.constant 0 : i32
    return %c0_i32, %c0_i32_0 : i32, i32
  }
  func.func @transform_5(%arg0: i32) -> (i32, i32) {
    %c0_i32 = arith.constant 0 : i32
    %c0_i32_0 = arith.constant 0 : i32
    %c0_i32_1 = arith.constant 0 : i32
    return %c0_i32, %c0_i32_0 : i32, i32
  }
  func.func @transform_6(%arg0: i32) -> (i32, i32) {
    %c0_i32 = arith.constant 0 : i32
    %c0_i32_0 = arith.constant 0 : i32
    %c0_i32_1 = arith.constant 0 : i32
    return %c0_i32, %c0_i32_0 : i32, i32
  }
  func.func @transform_7(%arg0: i32) -> (i32, i32) {
    %c0_i32 = arith.constant 0 : i32
    %c0_i32_0 = arith.constant 0 : i32
    %c0_i32_1 = arith.constant 0 : i32
    return %c0_i32, %c0_i32_0 : i32, i32
  }
  func.func @transform_8(%arg0: i32) -> (i32, i32) {
    %c0_i32 = arith.constant 0 : i32
    %c0_i32_0 = arith.constant 0 : i32
    %c0_i32_1 = arith.constant 0 : i32
    return %c0_i32, %c0_i32_0 : i32, i32
  }
  func.func @transform_9(%arg0: i32) -> (i32, i32) {
    %c0_i32 = arith.constant 0 : i32
    %c0_i32_0 = arith.constant 0 : i32
    %c0_i32_1 = arith.constant 0 : i32
    return %c0_i32, %c0_i32_0 : i32, i32
  }
  func.func @transform_10(%arg0: i32) -> (i32, i32) {
    %c0_i32 = arith.constant 0 : i32
    %c0_i32_0 = arith.constant 0 : i32
    %c0_i32_1 = arith.constant 0 : i32
    return %c0_i32, %c0_i32_0 : i32, i32
  }
  func.func @transform_11(%arg0: i32) -> (i32, i32) {
    %c0_i32 = arith.constant 0 : i32
    %c0_i32_0 = arith.constant 0 : i32
    %c0_i32_1 = arith.constant 0 : i32
    return %c0_i32, %c0_i32_0 : i32, i32
  }
  func.func @transform_12(%arg0: i32) -> (i32, i32) {
    %c0_i32 = arith.constant 0 : i32
    %c0_i32_0 = arith.constant 0 : i32
    %c0_i32_1 = arith.constant 0 : i32
    return %c0_i32, %c0_i32_0 : i32, i32
  }
  func.func @transform_13(%arg0: i32) -> (i32, i32) {
    %c0_i32 = arith.constant 0 : i32
    %c0_i32_0 = arith.constant 0 : i32
    %c0_i32_1 = arith.constant 0 : i32
    return %c0_i32, %c0_i32_0 : i32, i32
  }
  func.func @transform_14(%arg0: i32) -> (i32, i32) {
    %c0_i32 = arith.constant 0 : i32
    %c0_i32_0 = arith.constant 0 : i32
    %c0_i32_1 = arith.constant 0 : i32
    return %c0_i32, %c0_i32_0 : i32, i32
  }
  func.func @transform_15(%arg0: i32) -> (i32, i32) {
    %c0_i32 = arith.constant 0 : i32
    %c0_i32_0 = arith.constant 0 : i32
    %c0_i32_1 = arith.constant 0 : i32
    return %c0_i32, %c0_i32_0 : i32, i32
  }
  func.func @transform_16(%arg0: i32) -> (i32, i32) {
    %c0_i32 = arith.constant 0 : i32
    %c0_i32_0 = arith.constant 0 : i32
    %c0_i32_1 = arith.constant 0 : i32
    return %c0_i32, %c0_i32_0 : i32, i32
  }
  func.func @transform_17(%arg0: i32) -> (i32, i32) {
    %c0_i32 = arith.constant 0 : i32
    %c0_i32_0 = arith.constant 0 : i32
    %c0_i32_1 = arith.constant 0 : i32
    return %c0_i32, %c0_i32_0 : i32, i32
  }
  func.func @transform_18(%arg0: i32) -> (i32, i32) {
    %c0_i32 = arith.constant 0 : i32
    %c0_i32_0 = arith.constant 0 : i32
    %c0_i32_1 = arith.constant 0 : i32
    return %c0_i32, %c0_i32_0 : i32, i32
  }
}

</mosaic_0001>

<llo_original>
// kernel: eq.22
$region0: #{eq.22}
  %s0 = inlined_call_operand.vmem [shape: s32[2,16], index: 0, kind: input, shape index: {}]
  %s1 = inlined_call_operand.vmem [shape: s32[32], index: 1, kind: output, shape index: {}]
  $region1: #{eq.22} parent=0
    #allocation0 [shape = 'u8[4096]{0}', space=vmem, size = 0x1000, scoped, tag = 'scoped mem for output reshape']
    #allocation1 [shape = 'u8[4096]{0}', space=vmem, size = 0x1000, scoped, tag = 'scoped mem for input reshape']
    %s3 = sshllo.u32 0, 2
    %v4 = vld [vmem:[%s0] sm:%s3]
    %5 = vst [vmem:[#allocation1] sm:%s3] %v4
    %v6 = vld [vmem:[#allocation1] sm:$0x1]
    %vm7 = vcmask 130048
    %8 = vst.msk [vmem:[#allocation0] sm:$0x1] %vm7, %v6
    %s9 = scalar_lea.vmem [#allocation1], 1
    %v10 = vld [vmem:[%s9] sm:$0x1]
    %11 = vrot.lane.b32.xlu0 %v10, 16
    %v12 = vpop.permute.xlu0 %11
    %vm13 = vcmask 261248
    %14 = vst.msk [vmem:[#allocation0] sm:$0x1] %vm13, %v12
    %s16 = sshllo.u32 0, 1
    %v18 = vld [vmem:[#allocation0] sm:%s16]
    %s19 = sshllo.u32 0, 1
    %20 = vst [vmem:[%s1] sm:%s19] %v18

// kernel: _lambda_.3
$region0: #{_lambda_.3}
  #allocation0 [shape = 'u32[]', space=smem, size = 0x4, offset = 0x4, fixed_abs, tag = 'smem constant byte address 0x4 - core index']
  #allocation1 [shape = 'u32[144,128]{1,0:T(1,128)}', space=vmem, size = 0x12000, scoped, tag = 'internal scratch']
  %s0 = inlined_call_operand.vmem [shape: f32[32,10], index: 0, kind: input, shape index: {}]
  %s1 = inlined_call_operand.vmem [shape: f32[10,128], index: 1, kind: input, shape index: {}]
  %s2 = inlined_call_operand.vmem [shape: f32[1,128], index: 2, kind: input, shape index: {}]
  %s3 = inlined_call_operand.vmem [shape: f32[32,128], index: 3, kind: output, shape index: {}]
  %s4 = sld [smem:[#allocation0]]
  $region22: #{_lambda_.3} parent=0
    _
  %s6 = ssub.s32 1, %s4
  %s7 = scalar_select 0, %s6, %s4
  // Predicated region
  $region2: #{_lambda_.3} parent=0 // pred_check
    _
  $region3: #{_lambda_.3} parent=0 // pred_check_branch
    %9 = sbr.rel (0) target = $region5
  $region4: #{_lambda_.3} parent=0 // pred_region
    _
  $region5: #{_lambda_.3} parent=0 // pred_fallthru
    _
  // Predicated region
  $region6: #{_lambda_.3} parent=0 // pred_check
    _
  $region7: #{_lambda_.3} parent=0 // pred_check_branch
    %11 = sbr.rel (0) target = $region9
  $region8: #{_lambda_.3} parent=0 // pred_region
    _
  $region9: #{_lambda_.3} parent=0 // pred_fallthru
    _
  // Predicated region
  $region10: #{_lambda_.3} parent=0 // pred_check
    _
  $region11: #{_lambda_.3} parent=0 // pred_check_branch
    %13 = sbr.rel (0) target = $region13
  $region12: #{_lambda_.3} parent=0 // pred_region
    _
  $region13: #{_lambda_.3} parent=0 // pred_fallthru
    _
  %v14 = vld [vmem:[%s0] sm:$0xff]
  %v15 = vld [vmem:[%s0 + $0x8] sm:$0xff]
  %v16 = vld [vmem:[%s0 + $0x10] sm:$0xff]
  %v17 = vld [vmem:[%s0 + $0x18] sm:$0xff]
  %v18 = vld [vmem:[%s1] sm:$0xff]
  %v19 = vld [vmem:[%s1 + $0x8] sm:$0x3]
  %v20 = vld [vmem:[%s2] sm:$0x1]
  %v22 = vlaneseq
  %v23 = vshrl.u32 %v22, 7
  %v24 = vsub.s32 0, %v23
  %v25 = vrot.slane %v20, %v24
  %vm27 = vcmask 80896
  %v29 = vsel %vm27, %v14, 0
  %v32 = vsel %vm27, %v15, 0
  %v35 = vsel %vm27, %v16, 0
  %v38 = vsel %vm27, %v17, 0
  %vm40 = vcmask 1041408
  %v42 = vsel %vm40, %v19, 0
  %44 = vmatprep.subr.mxu0 0.0
  %45 = vmatpush1.msra.mxu0 %v18
  %46 = vmatprep.subr.mxu0 0.0
  %47 = vmatpush1.msra.mxu0 %v42
  %48 = vmatprep.subr.mxu0 0.0
  %49 = vmatpush1.msra.mxu0 0.0
  %50 = vmatprep.subr.mxu0 0.0
  %51 = vmatpush1.msra.mxu0 0.0
  %52 = vmatprep.subr.mxu0 0.0
  %53 = vmatpush1.msra.mxu0 0.0
  %54 = vmatprep.subr.mxu0 0.0
  %55 = vmatpush1.msra.mxu0 0.0
  %56 = vmatprep.subr.mxu0 0.0
  %57 = vmatpush1.msra.mxu0 0.0
  %58 = vmatprep.subr.mxu0 0.0
  %59 = vmatpush1.msra.mxu0 0.0
  %60 = vmatprep.subr.mxu0 0.0
  %61 = vmatpush1.msra.mxu0 0.0
  %62 = vmatprep.subr.mxu0 0.0
  %63 = vmatpush1.msra.mxu0 0.0
  %64 = vmatprep.subr.mxu0 0.0
  %65 = vmatpush1.msra.mxu0 0.0
  %66 = vmatprep.subr.mxu0 0.0
  %67 = vmatpush1.msra.mxu0 0.0
  %68 = vmatprep.subr.mxu0 0.0
  %69 = vmatpush1.msra.mxu0 0.0
  %70 = vmatprep.subr.mxu0 0.0
  %71 = vmatpush1.msra.mxu0 0.0
  %72 = vmatprep.subr.mxu0 0.0
  %73 = vmatpush1.msra.mxu0 0.0
  %74 = vmatprep.subr.mxu0 0.0
  %75 = vmatpush1.msra.mxu0 0.0
  %76 = vmatprep.subr.mxu0 0.0
  %77 = vmatpush1.msra.mxu0 0.0
  %78 = vmatprep.subr.mxu0 0.0
  %79 = vmatpush1.msra.mxu0 0.0
  %80 = vmatprep.subr.mxu0 0.0
  %81 = vmatpush1.msra.mxu0 0.0
  %82 = vmatprep.subr.mxu0 0.0
  %83 = vmatpush1.msra.mxu0 0.0
  %84 = vmatprep.subr.mxu0 0.0
  %85 = vmatpush1.msra.mxu0 0.0
  %86 = vmatprep.subr.mxu0 0.0
  %87 = vmatpush1.msra.mxu0 0.0
  %88 = vmatprep.subr.mxu0 0.0
  %89 = vmatpush1.msra.mxu0 0.0
  %90 = vmatprep.subr.mxu0 0.0
  %91 = vmatpush1.msra.mxu0 0.0
  %92 = vmatprep.subr.mxu0 0.0
  %93 = vmatpush1.msra.mxu0 0.0
  %94 = vmatprep.subr.mxu0 0.0
  %95 = vmatpush1.msra.mxu0 0.0
  %96 = vmatprep.subr.mxu0 0.0
  %97 = vmatpush1.msra.mxu0 0.0
  %98 = vmatprep.subr.mxu0 0.0
  %99 = vmatpush1.msra.mxu0 0.0
  %100 = vmatprep.subr.mxu0 0.0
  %101 = vmatpush1.msra.mxu0 0.0
  %102 = vmatprep.subr.mxu0 0.0
  %103 = vmatpush1.msra.mxu0 0.0
  %104 = vmatprep.subr.mxu0 0.0
  %105 = vmatpush1.msra.mxu0 0.0
  %106 = vmatprep.subr.mxu0 0.0
  %107 = vmatpush1.msra.mxu0 0.0
  %108 = vmatprep.mubr.f32.mxu0 0.0
  %109 = vmatmul.mubr.f32.gmra.mrb[0].mxu0 %v29
  %v110 = vpop.f32.mrb[0].mxu0
  %v111 = vadd.f32 %v25, %v110
  %v112 = vpop.f32.mrb[0].mxu0
  %113 = vmatprep.mubr.f32.mxu0 0.0
  %114 = vmatmul.mubr.f32.gmra.mrb[0].mxu0 %v32
  %v115 = vpop.f32.mrb[0].mxu0
  %v116 = vadd.f32 %v25, %v115
  %v117 = vpop.f32.mrb[0].mxu0
  %118 = vmatprep.mubr.f32.mxu0 0.0
  %119 = vmatmul.mubr.f32.gmra.mrb[0].mxu0 %v35
  %v120 = vpop.f32.mrb[0].mxu0
  %v121 = vadd.f32 %v25, %v120
  %v122 = vpop.f32.mrb[0].mxu0
  %123 = vmatprep.mubr.f32.mxu0 0.0
  %124 = vmatmul.mubr.f32.gmra.mrb[0].mxu0 %v38
  %v125 = vpop.f32.mrb[0].mxu0
  %v126 = vadd.f32 %v25, %v125
  %v127 = vpop.f32.mrb[0].mxu0
  %128 = vdwg.mxu0
  %129 = vst [vmem:[%s3] sm:$0xff] %v111
  %130 = vst [vmem:[%s3 + $0x8] sm:$0xff] %v116
  %131 = vst [vmem:[%s3 + $0x10] sm:$0xff] %v121
  %132 = vst [vmem:[%s3 + $0x18] sm:$0xff] %v126
  // Predicated region
  $region14: #{_lambda_.3} parent=0 // pred_check
    _
  $region15: #{_lambda_.3} parent=0 // pred_check_branch
    %134 = sbr.rel (0) target = $region17
  $region16: #{_lambda_.3} parent=0 // pred_region
    _
  $region17: #{_lambda_.3} parent=0 // pred_fallthru
    _
  // Predicated region
  $region18: #{_lambda_.3} parent=0 // pred_check
    _
  $region19: #{_lambda_.3} parent=0 // pred_check_branch
    %136 = sbr.rel (0) target = $region21
  $region20: #{_lambda_.3} parent=0 // pred_region
    _
  $region21: #{_lambda_.3} parent=0 // pred_fallthru
    _

// kernel: _lambda_.5
$region0: #{_lambda_.5}
  #allocation0 [shape = 'u32[]', space=smem, size = 0x4, offset = 0x4, fixed_abs, tag = 'smem constant byte address 0x4 - core index']
  #allocation1 [shape = 'u32[144,128]{1,0:T(1,128)}', space=vmem, size = 0x12000, scoped, tag = 'internal scratch']
  %s0 = inlined_call_operand.vmem [shape: f32[32,128], index: 0, kind: input, shape index: {}]
  %s1 = inlined_call_operand.vmem [shape: f32[3,128], index: 1, kind: input, shape index: {}]
  %s2 = inlined_call_operand.vmem [shape: f32[128,256], index: 2, kind: input, shape index: {}]
  %s3 = inlined_call_operand.vmem [shape: f32[1,256], index: 3, kind: input, shape index: {}]
  %s4 = inlined_call_operand.vmem [shape: f32[128,256], index: 4, kind: input, shape index: {}]
  %s5 = inlined_call_operand.vmem [shape: f32[1,256], index: 5, kind: input, shape index: {}]
  %s6 = inlined_call_operand.vmem [shape: f32[256,128], index: 6, kind: input, shape index: {}]
  %s7 = inlined_call_operand.vmem [shape: f32[1,128], index: 7, kind: input, shape index: {}]
  %s8 = inlined_call_operand.hbm [shape: f32[32,128], index: 8, kind: output, shape index: {}]
  %s9 = sld [smem:[#allocation0]]
  $region42: #{_lambda_.5} parent=0
    _
  %s11 = ssub.s32 1, %s9
  %s12 = scalar_select 0, %s11, %s9
  $region1: #{_lambda_.5} parent=0
    #allocation2 [shape = 'u8[16384]{0}', space=vmem, size = 0x4000, scoped, tag = 'output window, operand 0, single buffered']
    #allocation3 [shape = 's32[1]{0}', space=sflag, size = 0x4, scoped, tag = 'scoped memory for _lambda_.5']
    %13 = vsyncpa [#allocation3], 0
    // Predicated region
    $region2: #{_lambda_.5} parent=1 // pred_check
      _
    $region3: #{_lambda_.5} parent=1 // pred_check_branch
      %15 = sbr.rel (0) target = $region5
    $region4: #{_lambda_.5} parent=1 // pred_region
      _
    $region5: #{_lambda_.5} parent=1 // pred_fallthru
      _
    // Predicated region
    $region6: #{_lambda_.5} parent=1 // pred_check
      _
    $region7: #{_lambda_.5} parent=1 // pred_check_branch
      %17 = sbr.rel (0) target = $region9
    $region8: #{_lambda_.5} parent=1 // pred_region
      _
    $region9: #{_lambda_.5} parent=1 // pred_fallthru
      _
    // Predicated region
    $region10: #{_lambda_.5} parent=1 // pred_check
      _
    $region11: #{_lambda_.5} parent=1 // pred_check_branch
      %19 = sbr.rel (0) target = $region13
    $region12: #{_lambda_.5} parent=1 // pred_region
      _
    $region13: #{_lambda_.5} parent=1 // pred_fallthru
      _
    // Predicated region
    $region14: #{_lambda_.5} parent=1 // pred_check
      _
    $region15: #{_lambda_.5} parent=1 // pred_check_branch
      %21 = sbr.rel (0) target = $region17
    $region16: #{_lambda_.5} parent=1 // pred_region
      _
    $region17: #{_lambda_.5} parent=1 // pred_fallthru
      _
    // Predicated region
    $region18: #{_lambda_.5} parent=1 // pred_check
      _
    $region19: #{_lambda_.5} parent=1 // pred_check_branch
      %23 = sbr.rel (0) target = $region21
    $region20: #{_lambda_.5} parent=1 // pred_region
      _
    $region21: #{_lambda_.5} parent=1 // pred_fallthru
      _
    // Predicated region
    $region22: #{_lambda_.5} parent=1 // pred_check
      _
    $region23: #{_lambda_.5} parent=1 // pred_check_branch
      %25 = sbr.rel (0) target = $region25
    $region24: #{_lambda_.5} parent=1 // pred_region
      _
    $region25: #{_lambda_.5} parent=1 // pred_fallthru
      _
    // Predicated region
    $region26: #{_lambda_.5} parent=1 // pred_check
      _
    $region27: #{_lambda_.5} parent=1 // pred_check_branch
      %27 = sbr.rel (0) target = $region29
    $region28: #{_lambda_.5} parent=1 // pred_region
      _
    $region29: #{_lambda_.5} parent=1 // pred_fallthru
      _
    // Predicated region
    $region30: #{_lambda_.5} parent=1 // pred_check
      _
    $region31: #{_lambda_.5} parent=1 // pred_check_branch
      %29 = sbr.rel (0) target = $region33
    $region32: #{_lambda_.5} parent=1 // pred_region
      _
    $region33: #{_lambda_.5} parent=1 // pred_fallthru
      _
    %v30 = vld [vmem:[%s0] sm:$0xff]
    %v31 = vld [vmem:[%s0 + $0x8] sm:$0xff]
    %v32 = vld [vmem:[%s0 + $0x10] sm:$0xff]
    %v33 = vld [vmem:[%s0 + $0x18] sm:$0xff]
    %v34 = vld [vmem:[%s1] sm:$0x7]
    %v35 = vlaneseq
    %v36 = vshrl.u32 %v35, 7
    %v37 = vsub.s32 0, %v36
    %v38 = vrot.slane %v34, %v37
    %v39 = vmul.f32 %v30, %v38
    %v40 = vmul.f32 %v31, %v38
    %v41 = vmul.f32 %v32, %v38
    %v42 = vmul.f32 %v33, %v38
    %v43 = vtanh.pop %v39
    %v44 = vtanh.pop %v40
    %v45 = vtanh.pop %v41
    %v46 = vtanh.pop %v42
    %v47 = vlaneseq
    %v48 = vshrl.u32 %v47, 7
    %v49 = vsub.s32 1, %v48
    %v50 = vrot.slane %v34, %v49
    %v51 = vmul.f32 %v43, %v50
    %v52 = vmul.f32 %v44, %v50
    %v53 = vmul.f32 %v45, %v50
    %v54 = vmul.f32 %v46, %v50
    %v55 = vlaneseq
    %v56 = vshrl.u32 %v55, 7
    %v57 = vsub.s32 2, %v56
    %v58 = vrot.slane %v34, %v57
    %v59 = vadd.f32 %v51, %v58
    %v60 = vadd.f32 %v52, %v58
    %v61 = vadd.f32 %v53, %v58
    %v62 = vadd.f32 %v54, %v58
    %v63 = vld [vmem:[%s2] sm:$0xff]
    %v64 = vld [vmem:[%s2 + $0x8] sm:$0xff]
    %v65 = vld [vmem:[%s2 + $0x10] sm:$0xff]
    %v66 = vld [vmem:[%s2 + $0x18] sm:$0xff]
    %v67 = vld [vmem:[%s2 + $0x20] sm:$0xff]
    %v68 = vld [vmem:[%s2 + $0x28] sm:$0xff]
    %v69 = vld [vmem:[%s2 + $0x30] sm:$0xff]
    %v70 = vld [vmem:[%s2 + $0x38] sm:$0xff]
    %v71 = vld [vmem:[%s2 + $0x40] sm:$0xff]
    %v72 = vld [vmem:[%s2 + $0x48] sm:$0xff]
    %v73 = vld [vmem:[%s2 + $0x50] sm:$0xff]
    %v74 = vld [vmem:[%s2 + $0x58] sm:$0xff]
    %v75 = vld [vmem:[%s2 + $0x60] sm:$0xff]
    %v76 = vld [vmem:[%s2 + $0x68] sm:$0xff]
    %v77 = vld [vmem:[%s2 + $0x70] sm:$0xff]
    %v78 = vld [vmem:[%s2 + $0x78] sm:$0xff]
    %v79 = vld [vmem:[%s2 + $0x80] sm:$0xff]
    %v80 = vld [vmem:[%s2 + $0x88] sm:$0xff]
    %v81 = vld [vmem:[%s2 + $0x90] sm:$0xff]
    %v82 = vld [vmem:[%s2 + $0x98] sm:$0xff]
    %v83 = vld [vmem:[%s2 + $0xa0] sm:$0xff]
    %v84 = vld [vmem:[%s2 + $0xa8] sm:$0xff]
    %v85 = vld [vmem:[%s2 + $0xb0] sm:$0xff]
    %v86 = vld [vmem:[%s2 + $0xb8] sm:$0xff]
    %v87 = vld [vmem:[%s2 + $0xc0] sm:$0xff]
    %v88 = vld [vmem:[%s2 + $0xc8] sm:$0xff]
    %v89 = vld [vmem:[%s2 + $0xd0] sm:$0xff]
    %v90 = vld [vmem:[%s2 + $0xd8] sm:$0xff]
    %v91 = vld [vmem:[%s2 + $0xe0] sm:$0xff]
    %v92 = vld [vmem:[%s2 + $0xe8] sm:$0xff]
    %v93 = vld [vmem:[%s2 + $0xf0] sm:$0xff]
    %v94 = vld [vmem:[%s2 + $0xf8] sm:$0xff]
    %v95 = vld [vmem:[%s3] sm:$0x3]
    %v97 = vlaneseq
    %v98 = vshrl.u32 %v97, 7
    %v99 = vsub.s32 0, %v98
    %v100 = vrot.slane %v95, %v99
    %v101 = vlaneseq
    %v102 = vshrl.u32 %v101, 7
    %v103 = vsub.s32 1, %v102
    %v104 = vrot.slane %v95, %v103
    %107 = vmatprep.subr.mxu0 %v64
    %108 = vmatpush1.msra.mxu0 %v63
    %109 = vmatprep.subr.mxu0 %v66
    %110 = vmatpush1.msra.mxu0 %v65
    %111 = vmatprep.subr.mxu0 %v68
    %112 = vmatpush1.msra.mxu0 %v67
    %113 = vmatprep.subr.mxu0 %v70
    %114 = vmatpush1.msra.mxu0 %v69
    %115 = vmatprep.subr.mxu0 %v72
    %116 = vmatpush1.msra.mxu0 %v71
    %117 = vmatprep.subr.mxu0 %v74
    %118 = vmatpush1.msra.mxu0 %v73
    %119 = vmatprep.subr.mxu0 %v76
    %120 = vmatpush1.msra.mxu0 %v75
    %121 = vmatprep.subr.mxu0 %v78
    %122 = vmatpush1.msra.mxu0 %v77
    %123 = vmatprep.subr.mxu0 %v80
    %124 = vmatpush1.msra.mxu0 %v79
    %125 = vmatprep.subr.mxu0 %v82
    %126 = vmatpush1.msra.mxu0 %v81
    %127 = vmatprep.subr.mxu0 %v84
    %128 = vmatpush1.msra.mxu0 %v83
    %129 = vmatprep.subr.mxu0 %v86
    %130 = vmatpush1.msra.mxu0 %v85
    %131 = vmatprep.subr.mxu0 %v88
    %132 = vmatpush1.msra.mxu0 %v87
    %133 = vmatprep.subr.mxu0 %v90
    %134 = vmatpush1.msra.mxu0 %v89
    %135 = vmatprep.subr.mxu0 %v92
    %136 = vmatpush1.msra.mxu0 %v91
    %137 = vmatprep.subr.mxu0 %v94
    %138 = vmatpush1.msra.mxu0 %v93
    %139 = vmatprep.subr.mxu0 0.0
    %140 = vmatpush1.msra.mxu0 0.0
    %141 = vmatprep.subr.mxu0 0.0
    %142 = vmatpush1.msra.mxu0 0.0
    %143 = vmatprep.subr.mxu0 0.0
    %144 = vmatpush1.msra.mxu0 0.0
    %145 = vmatprep.subr.mxu0 0.0
    %146 = vmatpush1.msra.mxu0 0.0
    %147 = vmatprep.subr.mxu0 0.0
    %148 = vmatpush1.msra.mxu0 0.0
    %149 = vmatprep.subr.mxu0 0.0
    %150 = vmatpush1.msra.mxu0 0.0
    %151 = vmatprep.subr.mxu0 0.0
    %152 = vmatpush1.msra.mxu0 0.0
    %153 = vmatprep.subr.mxu0 0.0
    %154 = vmatpush1.msra.mxu0 0.0
    %155 = vmatprep.subr.mxu0 0.0
    %156 = vmatpush1.msra.mxu0 0.0
    %157 = vmatprep.subr.mxu0 0.0
    %158 = vmatpush1.msra.mxu0 0.0
    %159 = vmatprep.subr.mxu0 0.0
    %160 = vmatpush1.msra.mxu0 0.0
    %161 = vmatprep.subr.mxu0 0.0
    %162 = vmatpush1.msra.mxu0 0.0
    %163 = vmatprep.subr.mxu0 0.0
    %164 = vmatpush1.msra.mxu0 0.0
    %165 = vmatprep.subr.mxu0 0.0
    %166 = vmatpush1.msra.mxu0 0.0
    %167 = vmatprep.subr.mxu0 0.0
    %168 = vmatpush1.msra.mxu0 0.0
    %169 = vmatprep.subr.mxu0 0.0
    %170 = vmatpush1.msra.mxu0 0.0
    %171 = vmatprep.mubr.f32.mxu0 0.0
    %172 = vmatmul.mubr.f32.gmra.mrb[0].mxu0 %v59
    %v173 = vpop.f32.mrb[0].mxu0
    %v174 = vadd.f32 %v100, %v173
    %v175 = vpop.f32.mrb[0].mxu0
    %v176 = vadd.f32 %v104, %v175
    %177 = vmatprep.mubr.f32.mxu0 0.0
    %178 = vmatmul.mubr.f32.gmra.mrb[0].mxu0 %v60
    %v179 = vpop.f32.mrb[0].mxu0
    %v180 = vadd.f32 %v100, %v179
    %v181 = vpop.f32.mrb[0].mxu0
    %v182 = vadd.f32 %v104, %v181
    %183 = vmatprep.mubr.f32.mxu0 0.0
    %184 = vmatmul.mubr.f32.gmra.mrb[0].mxu0 %v61
    %v185 = vpop.f32.mrb[0].mxu0
    %v186 = vadd.f32 %v100, %v185
    %v187 = vpop.f32.mrb[0].mxu0
    %v188 = vadd.f32 %v104, %v187
    %189 = vmatprep.mubr.f32.mxu0 0.0
    %190 = vmatmul.mubr.f32.gmra.mrb[0].mxu0 %v62
    %v191 = vpop.f32.mrb[0].mxu0
    %v192 = vadd.f32 %v100, %v191
    %v193 = vpop.f32.mrb[0].mxu0
    %v194 = vadd.f32 %v104, %v193
    %195 = vdwg.mxu0
    %v196 = vld [vmem:[%s4] sm:$0xff]
    %v197 = vld [vmem:[%s4 + $0x8] sm:$0xff]
    %v198 = vld [vmem:[%s4 + $0x10] sm:$0xff]
    %v199 = vld [vmem:[%s4 + $0x18] sm:$0xff]
    %v200 = vld [vmem:[%s4 + $0x20] sm:$0xff]
    %v201 = vld [vmem:[%s4 + $0x28] sm:$0xff]
    %v202 = vld [vmem:[%s4 + $0x30] sm:$0xff]
    %v203 = vld [vmem:[%s4 + $0x38] sm:$0xff]
    %v204 = vld [vmem:[%s4 + $0x40] sm:$0xff]
    %v205 = vld [vmem:[%s4 + $0x48] sm:$0xff]
    %v206 = vld [vmem:[%s4 + $0x50] sm:$0xff]
    %v207 = vld [vmem:[%s4 + $0x58] sm:$0xff]
    %v208 = vld [vmem:[%s4 + $0x60] sm:$0xff]
    %v209 = vld [vmem:[%s4 + $0x68] sm:$0xff]
    %v210 = vld [vmem:[%s4 + $0x70] sm:$0xff]
    %v211 = vld [vmem:[%s4 + $0x78] sm:$0xff]
    %v212 = vld [vmem:[%s4 + $0x80] sm:$0xff]
    %v213 = vld [vmem:[%s4 + $0x88] sm:$0xff]
    %v214 = vld [vmem:[%s4 + $0x90] sm:$0xff]
    %v215 = vld [vmem:[%s4 + $0x98] sm:$0xff]
    %v216 = vld [vmem:[%s4 + $0xa0] sm:$0xff]
    %v217 = vld [vmem:[%s4 + $0xa8] sm:$0xff]
    %v218 = vld [vmem:[%s4 + $0xb0] sm:$0xff]
    %v219 = vld [vmem:[%s4 + $0xb8] sm:$0xff]
    %v220 = vld [vmem:[%s4 + $0xc0] sm:$0xff]
    %v221 = vld [vmem:[%s4 + $0xc8] sm:$0xff]
    %v222 = vld [vmem:[%s4 + $0xd0] sm:$0xff]
    %v223 = vld [vmem:[%s4 + $0xd8] sm:$0xff]
    %v224 = vld [vmem:[%s4 + $0xe0] sm:$0xff]
    %v225 = vld [vmem:[%s4 + $0xe8] sm:$0xff]
    %v226 = vld [vmem:[%s4 + $0xf0] sm:$0xff]
    %v227 = vld [vmem:[%s4 + $0xf8] sm:$0xff]
    %v228 = vld [vmem:[%s5] sm:$0x3]
    %v230 = vlaneseq
    %v231 = vshrl.u32 %v230, 7
    %v232 = vsub.s32 0, %v231
    %v233 = vrot.slane %v228, %v232
    %v234 = vlaneseq
    %v235 = vshrl.u32 %v234, 7
    %v236 = vsub.s32 1, %v235
    %v237 = vrot.slane %v228, %v236
    %240 = vmatprep.subr.mxu0 %v197
    %241 = vmatpush1.msra.mxu0 %v196
    %242 = vmatprep.subr.mxu0 %v199
    %243 = vmatpush1.msra.mxu0 %v198
    %244 = vmatprep.subr.mxu0 %v201
    %245 = vmatpush1.msra.mxu0 %v200
    %246 = vmatprep.subr.mxu0 %v203
    %247 = vmatpush1.msra.mxu0 %v202
    %248 = vmatprep.subr.mxu0 %v205
    %249 = vmatpush1.msra.mxu0 %v204
    %250 = vmatprep.subr.mxu0 %v207
    %251 = vmatpush1.msra.mxu0 %v206
    %252 = vmatprep.subr.mxu0 %v209
    %253 = vmatpush1.msra.mxu0 %v208
    %254 = vmatprep.subr.mxu0 %v211
    %255 = vmatpush1.msra.mxu0 %v210
    %256 = vmatprep.subr.mxu0 %v213
    %257 = vmatpush1.msra.mxu0 %v212
    %258 = vmatprep.subr.mxu0 %v215
    %259 = vmatpush1.msra.mxu0 %v214
    %260 = vmatprep.subr.mxu0 %v217
    %261 = vmatpush1.msra.mxu0 %v216
    %262 = vmatprep.subr.mxu0 %v219
    %263 = vmatpush1.msra.mxu0 %v218
    %264 = vmatprep.subr.mxu0 %v221
    %265 = vmatpush1.msra.mxu0 %v220
    %266 = vmatprep.subr.mxu0 %v223
    %267 = vmatpush1.msra.mxu0 %v222
    %268 = vmatprep.subr.mxu0 %v225
    %269 = vmatpush1.msra.mxu0 %v224
    %270 = vmatprep.subr.mxu0 %v227
    %271 = vmatpush1.msra.mxu0 %v226
    %272 = vmatprep.subr.mxu0 0.0
    %273 = vmatpush1.msra.mxu0 0.0
    %274 = vmatprep.subr.mxu0 0.0
    %275 = vmatpush1.msra.mxu0 0.0
    %276 = vmatprep.subr.mxu0 0.0
    %277 = vmatpush1.msra.mxu0 0.0
    %278 = vmatprep.subr.mxu0 0.0
    %279 = vmatpush1.msra.mxu0 0.0
    %280 = vmatprep.subr.mxu0 0.0
    %281 = vmatpush1.msra.mxu0 0.0
    %282 = vmatprep.subr.mxu0 0.0
    %283 = vmatpush1.msra.mxu0 0.0
    %284 = vmatprep.subr.mxu0 0.0
    %285 = vmatpush1.msra.mxu0 0.0
    %286 = vmatprep.subr.mxu0 0.0
    %287 = vmatpush1.msra.mxu0 0.0
    %288 = vmatprep.subr.mxu0 0.0
    %289 = vmatpush1.msra.mxu0 0.0
    %290 = vmatprep.subr.mxu0 0.0
    %291 = vmatpush1.msra.mxu0 0.0
    %292 = vmatprep.subr.mxu0 0.0
    %293 = vmatpush1.msra.mxu0 0.0
    %294 = vmatprep.subr.mxu0 0.0
    %295 = vmatpush1.msra.mxu0 0.0
    %296 = vmatprep.subr.mxu0 0.0
    %297 = vmatpush1.msra.mxu0 0.0
    %298 = vmatprep.subr.mxu0 0.0
    %299 = vmatpush1.msra.mxu0 0.0
    %300 = vmatprep.subr.mxu0 0.0
    %301 = vmatpush1.msra.mxu0 0.0
    %302 = vmatprep.subr.mxu0 0.0
    %303 = vmatpush1.msra.mxu0 0.0
    %304 = vmatprep.mubr.f32.mxu0 0.0
    %305 = vmatmul.mubr.f32.gmra.mrb[0].mxu0 %v59
    %v306 = vpop.f32.mrb[0].mxu0
    %v307 = vadd.f32 %v233, %v306
    %v308 = vpop.f32.mrb[0].mxu0
    %v309 = vadd.f32 %v237, %v308
    %310 = vmatprep.mubr.f32.mxu0 0.0
    %311 = vmatmul.mubr.f32.gmra.mrb[0].mxu0 %v60
    %v312 = vpop.f32.mrb[0].mxu0
    %v313 = vadd.f32 %v233, %v312
    %v314 = vpop.f32.mrb[0].mxu0
    %v315 = vadd.f32 %v237, %v314
    %316 = vmatprep.mubr.f32.mxu0 0.0
    %317 = vmatmul.mubr.f32.gmra.mrb[0].mxu0 %v61
    %v318 = vpop.f32.mrb[0].mxu0
    %v319 = vadd.f32 %v233, %v318
    %v320 = vpop.f32.mrb[0].mxu0
    %v321 = vadd.f32 %v237, %v320
    %322 = vmatprep.mubr.f32.mxu0 0.0
    %323 = vmatmul.mubr.f32.gmra.mrb[0].mxu0 %v62
    %v324 = vpop.f32.mrb[0].mxu0
    %v325 = vadd.f32 %v233, %v324
    %v326 = vpop.f32.mrb[0].mxu0
    %v327 = vadd.f32 %v237, %v326
    %328 = vdwg.mxu0
    %v329 = vxor.u32 %v174, 2147483648
    %v330 = vxor.u32 %v176, 2147483648
    %v331 = vxor.u32 %v180, 2147483648
    %v332 = vxor.u32 %v182, 2147483648
    %v333 = vxor.u32 %v186, 2147483648
    %v334 = vxor.u32 %v188, 2147483648
    %v335 = vxor.u32 %v192, 2147483648
    %v336 = vxor.u32 %v194, 2147483648
    %v337 = vmul.f32 %v329, 1.442695
    %v338 = vpow.pop %v337
    %v339 = vmul.f32 %v330, 1.442695
    %v340 = vpow.pop %v339
    %v341 = vmul.f32 %v331, 1.442695
    %v342 = vpow.pop %v341
    %v343 = vmul.f32 %v332, 1.442695
    %v344 = vpow.pop %v343
    %v345 = vmul.f32 %v333, 1.442695
    %v346 = vpow.pop %v345
    %v347 = vmul.f32 %v334, 1.442695
    %v348 = vpow.pop %v347
    %v349 = vmul.f32 %v335, 1.442695
    %v350 = vpow.pop %v349
    %v351 = vmul.f32 %v336, 1.442695
    %v352 = vpow.pop %v351
    %v353 = vadd.f32 %v338, 1.0
    %v354 = vadd.f32 %v340, 1.0
    %v355 = vadd.f32 %v342, 1.0
    %v356 = vadd.f32 %v344, 1.0
    %v357 = vadd.f32 %v346, 1.0
    %v358 = vadd.f32 %v348, 1.0
    %v359 = vadd.f32 %v350, 1.0
    %v360 = vadd.f32 %v352, 1.0
    %v361 = vrcp.pop %v353
    %v362 = vmul.f32 1.0, %v361
    %v363 = vrcp.pop %v354
    %v364 = vmul.f32 1.0, %v363
    %v365 = vrcp.pop %v355
    %v366 = vmul.f32 1.0, %v365
    %v367 = vrcp.pop %v356
    %v368 = vmul.f32 1.0, %v367
    %v369 = vrcp.pop %v357
    %v370 = vmul.f32 1.0, %v369
    %v371 = vrcp.pop %v358
    %v372 = vmul.f32 1.0, %v371
    %v373 = vrcp.pop %v359
    %v374 = vmul.f32 1.0, %v373
    %v375 = vrcp.pop %v360
    %v376 = vmul.f32 1.0, %v375
    %v377 = vmul.f32 %v174, %v362
    %v378 = vmul.f32 %v176, %v364
    %v379 = vmul.f32 %v180, %v366
    %v380 = vmul.f32 %v182, %v368
    %v381 = vmul.f32 %v186, %v370
    %v382 = vmul.f32 %v188, %v372
    %v383 = vmul.f32 %v192, %v374
    %v384 = vmul.f32 %v194, %v376
    %v385 = vmul.f32 %v377, %v307
    %v386 = vmul.f32 %v378, %v309
    %v387 = vmul.f32 %v379, %v313
    %v388 = vmul.f32 %v380, %v315
    %v389 = vmul.f32 %v381, %v319
    %v390 = vmul.f32 %v382, %v321
    %v391 = vmul.f32 %v383, %v325
    %v392 = vmul.f32 %v384, %v327
    %v393 = vld [vmem:[%s6] sm:$0xff]
    %v394 = vld [vmem:[%s6 + $0x8] sm:$0xff]
    %v395 = vld [vmem:[%s6 + $0x10] sm:$0xff]
    %v396 = vld [vmem:[%s6 + $0x18] sm:$0xff]
    %v397 = vld [vmem:[%s6 + $0x20] sm:$0xff]
    %v398 = vld [vmem:[%s6 + $0x28] sm:$0xff]
    %v399 = vld [vmem:[%s6 + $0x30] sm:$0xff]
    %v400 = vld [vmem:[%s6 + $0x38] sm:$0xff]
    %v401 = vld [vmem:[%s6 + $0x40] sm:$0xff]
    %v402 = vld [vmem:[%s6 + $0x48] sm:$0xff]
    %v403 = vld [vmem:[%s6 + $0x50] sm:$0xff]
    %v404 = vld [vmem:[%s6 + $0x58] sm:$0xff]
    %v405 = vld [vmem:[%s6 + $0x60] sm:$0xff]
    %v406 = vld [vmem:[%s6 + $0x68] sm:$0xff]
    %v407 = vld [vmem:[%s6 + $0x70] sm:$0xff]
    %v408 = vld [vmem:[%s6 + $0x78] sm:$0xff]
    %v409 = vld [vmem:[%s6 + $0x80] sm:$0xff]
    %v410 = vld [vmem:[%s6 + $0x88] sm:$0xff]
    %v411 = vld [vmem:[%s6 + $0x90] sm:$0xff]
    %v412 = vld [vmem:[%s6 + $0x98] sm:$0xff]
    %v413 = vld [vmem:[%s6 + $0xa0] sm:$0xff]
    %v414 = vld [vmem:[%s6 + $0xa8] sm:$0xff]
    %v415 = vld [vmem:[%s6 + $0xb0] sm:$0xff]
    %v416 = vld [vmem:[%s6 + $0xb8] sm:$0xff]
    %v417 = vld [vmem:[%s6 + $0xc0] sm:$0xff]
    %v418 = vld [vmem:[%s6 + $0xc8] sm:$0xff]
    %v419 = vld [vmem:[%s6 + $0xd0] sm:$0xff]
    %v420 = vld [vmem:[%s6 + $0xd8] sm:$0xff]
    %v421 = vld [vmem:[%s6 + $0xe0] sm:$0xff]
    %v422 = vld [vmem:[%s6 + $0xe8] sm:$0xff]
    %v423 = vld [vmem:[%s6 + $0xf0] sm:$0xff]
    %v424 = vld [vmem:[%s6 + $0xf8] sm:$0xff]
    %425 = vmatprep.subr.mxu0 0.0
    %426 = vmatpush1.msra.mxu0 %v393
    %427 = vmatprep.subr.mxu0 0.0
    %428 = vmatpush1.msra.mxu0 %v394
    %429 = vmatprep.subr.mxu0 0.0
    %430 = vmatpush1.msra.mxu0 %v395
    %431 = vmatprep.subr.mxu0 0.0
    %432 = vmatpush1.msra.mxu0 %v396
    %433 = vmatprep.subr.mxu0 0.0
    %434 = vmatpush1.msra.mxu0 %v397
    %435 = vmatprep.subr.mxu0 0.0
    %436 = vmatpush1.msra.mxu0 %v398
    %437 = vmatprep.subr.mxu0 0.0
    %438 = vmatpush1.msra.mxu0 %v399
    %439 = vmatprep.subr.mxu0 0.0
    %440 = vmatpush1.msra.mxu0 %v400
    %441 = vmatprep.subr.mxu0 0.0
    %442 = vmatpush1.msra.mxu0 %v401
    %443 = vmatprep.subr.mxu0 0.0
    %444 = vmatpush1.msra.mxu0 %v402
    %445 = vmatprep.subr.mxu0 0.0
    %446 = vmatpush1.msra.mxu0 %v403
    %447 = vmatprep.subr.mxu0 0.0
    %448 = vmatpush1.msra.mxu0 %v404
    %449 = vmatprep.subr.mxu0 0.0
    %450 = vmatpush1.msra.mxu0 %v405
    %451 = vmatprep.subr.mxu0 0.0
    %452 = vmatpush1.msra.mxu0 %v406
    %453 = vmatprep.subr.mxu0 0.0
    %454 = vmatpush1.msra.mxu0 %v407
    %455 = vmatprep.subr.mxu0 0.0
    %456 = vmatpush1.msra.mxu0 %v408
    %457 = vmatprep.subr.mxu0 0.0
    %458 = vmatpush1.msra.mxu0 %v409
    %459 = vmatprep.subr.mxu0 0.0
    %460 = vmatpush1.msra.mxu0 %v410
    %461 = vmatprep.subr.mxu0 0.0
    %462 = vmatpush1.msra.mxu0 %v411
    %463 = vmatprep.subr.mxu0 0.0
    %464 = vmatpush1.msra.mxu0 %v412
    %465 = vmatprep.subr.mxu0 0.0
    %466 = vmatpush1.msra.mxu0 %v413
    %467 = vmatprep.subr.mxu0 0.0
    %468 = vmatpush1.msra.mxu0 %v414
    %469 = vmatprep.subr.mxu0 0.0
    %470 = vmatpush1.msra.mxu0 %v415
    %471 = vmatprep.subr.mxu0 0.0
    %472 = vmatpush1.msra.mxu0 %v416
    %473 = vmatprep.subr.mxu0 0.0
    %474 = vmatpush1.msra.mxu0 %v417
    %475 = vmatprep.subr.mxu0 0.0
    %476 = vmatpush1.msra.mxu0 %v418
    %477 = vmatprep.subr.mxu0 0.0
    %478 = vmatpush1.msra.mxu0 %v419
    %479 = vmatprep.subr.mxu0 0.0
    %480 = vmatpush1.msra.mxu0 %v420
    %481 = vmatprep.subr.mxu0 0.0
    %482 = vmatpush1.msra.mxu0 %v421
    %483 = vmatprep.subr.mxu0 0.0
    %484 = vmatpush1.msra.mxu0 %v422
    %485 = vmatprep.subr.mxu0 0.0
    %486 = vmatpush1.msra.mxu0 %v423
    %487 = vmatprep.subr.mxu0 0.0
    %488 = vmatpush1.msra.mxu0 %v424
    %489 = vmatprep.mubr.f32.mxu0 %v386
    %490 = vmatmul.mubr.f32.gmra.mrb[0].mxu0 %v385
    %v491 = vpop.f32.mrb[0].mxu0
    %v492 = vadd.f32 0.0, %v491
    %v493 = vpop.f32.mrb[0].mxu0
    %494 = vmatprep.mubr.f32.mxu0 %v388
    %495 = vmatmul.mubr.f32.gmra.mrb[0].mxu0 %v387
    %v496 = vpop.f32.mrb[0].mxu0
    %v497 = vadd.f32 0.0, %v496
    %v498 = vpop.f32.mrb[0].mxu0
    %499 = vmatprep.mubr.f32.mxu0 %v390
    %500 = vmatmul.mubr.f32.gmra.mrb[0].mxu0 %v389
    %v501 = vpop.f32.mrb[0].mxu0
    %v502 = vadd.f32 0.0, %v501
    %v503 = vpop.f32.mrb[0].mxu0
    %504 = vmatprep.mubr.f32.mxu0 %v392
    %505 = vmatmul.mubr.f32.gmra.mrb[0].mxu0 %v391
    %v506 = vpop.f32.mrb[0].mxu0
    %v507 = vadd.f32 0.0, %v506
    %v508 = vpop.f32.mrb[0].mxu0
    %509 = vdwg.mxu0
    %v510 = vadd.f32 %v59, %v492
    %v511 = vadd.f32 %v60, %v497
    %v512 = vadd.f32 %v61, %v502
    %v513 = vadd.f32 %v62, %v507
    %v514 = vld [vmem:[%s7] sm:$0x1]
    %v516 = vlaneseq
    %v517 = vshrl.u32 %v516, 7
    %v518 = vsub.s32 0, %v517
    %v519 = vrot.slane %v514, %v518
    %v521 = vadd.f32 %v510, %v519
    %v522 = vadd.f32 %v511, %v519
    %v523 = vadd.f32 %v512, %v519
    %v524 = vadd.f32 %v513, %v519
    %525 = vst [vmem:[#allocation2] sm:$0xff] %v521
    %526 = vst [vmem:[#allocation2 + $0x8] sm:$0xff] %v522
    %527 = vst [vmem:[#allocation2 + $0x10] sm:$0xff] %v523
    %528 = vst [vmem:[#allocation2 + $0x18] sm:$0xff] %v524
    // Predicated region
    $region34: #{_lambda_.5} parent=1 // pred_check
      _
    $region35: #{_lambda_.5} parent=1 // pred_check_branch
      %530 = sbr.rel (0) target = $region37
    $region36: #{_lambda_.5} parent=1 // pred_region
      %s532 = ssub.s32 512, 512
      %533 = vsyncadd [#allocation3], %s532
      %s534 = sshll.u32 [#allocation2], 4
      %s535 = int_to_ptr.vmem [resolvable:$true] %s534
      %540 = dma.vmem_to_hbm [thread:$0]  %s535, 512, %s8, [#allocation3], 128, 128, 8
    $region37: #{_lambda_.5} parent=1 // pred_fallthru
      _
    // Predicated region
    $region38: #{_lambda_.5} parent=1 // pred_check
      _
    $region39: #{_lambda_.5} parent=1 // pred_check_branch
      %542 = sbr.rel (0) target = $region41
    $region40: #{_lambda_.5} parent=1 // pred_region
      %543 = dma.done [#allocation3], 512
    $region41: #{_lambda_.5} parent=1 // pred_fallthru
      _
    %544 = vsyncpa [#allocation3], 1

// kernel: _lambda_.4
$region0: #{_lambda_.4}
  #allocation0 [shape = 'u32[]', space=smem, size = 0x4, offset = 0x4, fixed_abs, tag = 'smem constant byte address 0x4 - core index']
  #allocation1 [shape = 'u32[144,128]{1,0:T(1,128)}', space=vmem, size = 0x12000, scoped, tag = 'internal scratch']
  %s0 = inlined_call_operand.vmem [shape: f32[32,128], index: 0, kind: input, shape index: {}]
  %s1 = inlined_call_operand.vmem [shape: f32[3,128], index: 1, kind: input, shape index: {}]
  %s2 = inlined_call_operand.vmem [shape: f32[128,64], index: 2, kind: input, shape index: {}]
  %s3 = inlined_call_operand.vmem [shape: f32[1,64], index: 3, kind: input, shape index: {}]
  %s4 = inlined_call_operand.vmem [shape: f32[3,64], index: 4, kind: input, shape index: {}]
  %s5 = inlined_call_operand.vmem [shape: f32[64,128], index: 5, kind: input, shape index: {}]
  %s6 = inlined_call_operand.vmem [shape: f32[1,128], index: 6, kind: input, shape index: {}]
  %s7 = inlined_call_operand.vmem [shape: f32[128,128], index: 7, kind: input, shape index: {}]
  %s8 = inlined_call_operand.vmem [shape: f32[1,128], index: 8, kind: input, shape index: {}]
  %s9 = inlined_call_operand.vmem [shape: f32[3,64], index: 9, kind: input, shape index: {}]
  %s10 = inlined_call_operand.vmem [shape: f32[64,192], index: 10, kind: input, shape index: {}]
  %s11 = inlined_call_operand.vmem [shape: f32[1,192], index: 11, kind: input, shape index: {}]
  %s12 = inlined_call_operand.vmem [shape: f32[128,128], index: 12, kind: input, shape index: {}]
  %s13 = inlined_call_operand.vmem [shape: f32[1,128], index: 13, kind: input, shape index: {}]
  %s14 = inlined_call_operand.vmem [shape: f32[32,64], index: 14, kind: input, shape index: {}]
  %s15 = inlined_call_operand.vmem [shape: f32[32,64], index: 15, kind: input, shape index: {}]
  %s16 = inlined_call_operand.vmem [shape: f32[64,64], index: 16, kind: input, shape index: {}]
  %s17 = inlined_call_operand.vmem [shape: f32[32,32], index: 17, kind: input, shape index: {}]
  %s18 = inlined_call_operand.vmem [shape: f32[32,128], index: 18, kind: output, shape index: {}]
  %s19 = sld [smem:[#allocation0]]
  $region82: #{_lambda_.4} parent=0
    _
  %s21 = ssub.s32 1, %s19
  %s22 = scalar_select 0, %s21, %s19
  // Predicated region
  $region2: #{_lambda_.4} parent=0 // pred_check
    _
  $region3: #{_lambda_.4} parent=0 // pred_check_branch
    %24 = sbr.rel (0) target = $region5
  $region4: #{_lambda_.4} parent=0 // pred_region
    _
  $region5: #{_lambda_.4} parent=0 // pred_fallthru
    _
  // Predicated region
  $region6: #{_lambda_.4} parent=0 // pred_check
    _
  $region7: #{_lambda_.4} parent=0 // pred_check_branch
    %26 = sbr.rel (0) target = $region9
  $region8: #{_lambda_.4} parent=0 // pred_region
    _
  $region9: #{_lambda_.4} parent=0 // pred_fallthru
    _
  // Predicated region
  $region10: #{_lambda_.4} parent=0 // pred_check
    _
  $region11: #{_lambda_.4} parent=0 // pred_check_branch
    %28 = sbr.rel (0) target = $region13
  $region12: #{_lambda_.4} parent=0 // pred_region
    _
  $region13: #{_lambda_.4} parent=0 // pred_fallthru
    _
  // Predicated region
  $region14: #{_lambda_.4} parent=0 // pred_check
    _
  $region15: #{_lambda_.4} parent=0 // pred_check_branch
    %30 = sbr.rel (0) target = $region17
  $region16: #{_lambda_.4} parent=0 // pred_region
    _
  $region17: #{_lambda_.4} parent=0 // pred_fallthru
    _
  // Predicated region
  $region18: #{_lambda_.4} parent=0 // pred_check
    _
  $region19: #{_lambda_.4} parent=0 // pred_check_branch
    %32 = sbr.rel (0) target = $region21
  $region20: #{_lambda_.4} parent=0 // pred_region
    _
  $region21: #{_lambda_.4} parent=0 // pred_fallthru
    _
  // Predicated region
  $region22: #{_lambda_.4} parent=0 // pred_check
    _
  $region23: #{_lambda_.4} parent=0 // pred_check_branch
    %34 = sbr.rel (0) target = $region25
  $region24: #{_lambda_.4} parent=0 // pred_region
    _
  $region25: #{_lambda_.4} parent=0 // pred_fallthru
    _
  // Predicated region
  $region26: #{_lambda_.4} parent=0 // pred_check
    _
  $region27: #{_lambda_.4} parent=0 // pred_check_branch
    %36 = sbr.rel (0) target = $region29
  $region28: #{_lambda_.4} parent=0 // pred_region
    _
  $region29: #{_lambda_.4} parent=0 // pred_fallthru
    _
  // Predicated region
  $region30: #{_lambda_.4} parent=0 // pred_check
    _
  $region31: #{_lambda_.4} parent=0 // pred_check_branch
    %38 = sbr.rel (0) target = $region33
  $region32: #{_lambda_.4} parent=0 // pred_region
    _
  $region33: #{_lambda_.4} parent=0 // pred_fallthru
    _
  // Predicated region
  $region34: #{_lambda_.4} parent=0 // pred_check
    _
  $region35: #{_lambda_.4} parent=0 // pred_check_branch
    %40 = sbr.rel (0) target = $region37
  $region36: #{_lambda_.4} parent=0 // pred_region
    _
  $region37: #{_lambda_.4} parent=0 // pred_fallthru
    _
  // Predicated region
  $region38: #{_lambda_.4} parent=0 // pred_check
    _
  $region39: #{_lambda_.4} parent=0 // pred_check_branch
    %42 = sbr.rel (0) target = $region41
  $region40: #{_lambda_.4} parent=0 // pred_region
    _
  $region41: #{_lambda_.4} parent=0 // pred_fallthru
    _
  // Predicated region
  $region42: #{_lambda_.4} parent=0 // pred_check
    _
  $region43: #{_lambda_.4} parent=0 // pred_check_branch
    %44 = sbr.rel (0) target = $region45
  $region44: #{_lambda_.4} parent=0 // pred_region
    _
  $region45: #{_lambda_.4} parent=0 // pred_fallthru
    _
  // Predicated region
  $region46: #{_lambda_.4} parent=0 // pred_check
    _
  $region47: #{_lambda_.4} parent=0 // pred_check_branch
    %46 = sbr.rel (0) target = $region49
  $region48: #{_lambda_.4} parent=0 // pred_region
    _
  $region49: #{_lambda_.4} parent=0 // pred_fallthru
    _
  // Predicated region
  $region50: #{_lambda_.4} parent=0 // pred_check
    _
  $region51: #{_lambda_.4} parent=0 // pred_check_branch
    %48 = sbr.rel (0) target = $region53
  $region52: #{_lambda_.4} parent=0 // pred_region
    _
  $region53: #{_lambda_.4} parent=0 // pred_fallthru
    _
  // Predicated region
  $region54: #{_lambda_.4} parent=0 // pred_check
    _
  $region55: #{_lambda_.4} parent=0 // pred_check_branch
    %50 = sbr.rel (0) target = $region57
  $region56: #{_lambda_.4} parent=0 // pred_region
    _
  $region57: #{_lambda_.4} parent=0 // pred_fallthru
    _
  // Predicated region
  $region58: #{_lambda_.4} parent=0 // pred_check
    _
  $region59: #{_lambda_.4} parent=0 // pred_check_branch
    %52 = sbr.rel (0) target = $region61
  $region60: #{_lambda_.4} parent=0 // pred_region
    _
  $region61: #{_lambda_.4} parent=0 // pred_fallthru
    _
  // Predicated region
  $region62: #{_lambda_.4} parent=0 // pred_check
    _
  $region63: #{_lambda_.4} parent=0 // pred_check_branch
    %54 = sbr.rel (0) target = $region65
  $region64: #{_lambda_.4} parent=0 // pred_region
    _
  $region65: #{_lambda_.4} parent=0 // pred_fallthru
    _
  // Predicated region
  $region66: #{_lambda_.4} parent=0 // pred_check
    _
  $region67: #{_lambda_.4} parent=0 // pred_check_branch
    %56 = sbr.rel (0) target = $region69
  $region68: #{_lambda_.4} parent=0 // pred_region
    _
  $region69: #{_lambda_.4} parent=0 // pred_fallthru
    _
  // Predicated region
  $region70: #{_lambda_.4} parent=0 // pred_check
    _
  $region71: #{_lambda_.4} parent=0 // pred_check_branch
    %58 = sbr.rel (0) target = $region73
  $region72: #{_lambda_.4} parent=0 // pred_region
    _
  $region73: #{_lambda_.4} parent=0 // pred_fallthru
    _
  %v59 = vld [vmem:[%s0] sm:$0xff]
  %v60 = vld [vmem:[%s0 + $0x8] sm:$0xff]
  %v61 = vld [vmem:[%s0 + $0x10] sm:$0xff]
  %v62 = vld [vmem:[%s0 + $0x18] sm:$0xff]
  %v63 = vld [vmem:[%s1] sm:$0x7]
  %v64 = vlaneseq
  %v65 = vshrl.u32 %v64, 7
  %v66 = vsub.s32 0, %v65
  %v67 = vrot.slane %v63, %v66
  %v68 = vmul.f32 %v59, %v67
  %v69 = vmul.f32 %v60, %v67
  %v70 = vmul.f32 %v61, %v67
  %v71 = vmul.f32 %v62, %v67
  %v72 = vtanh.pop %v68
  %v73 = vtanh.pop %v69
  %v74 = vtanh.pop %v70
  %v75 = vtanh.pop %v71
  %v76 = vlaneseq
  %v77 = vshrl.u32 %v76, 7
  %v78 = vsub.s32 1, %v77
  %v79 = vrot.slane %v63, %v78
  %v80 = vmul.f32 %v72, %v79
  %v81 = vmul.f32 %v73, %v79
  %v82 = vmul.f32 %v74, %v79
  %v83 = vmul.f32 %v75, %v79
  %v84 = vlaneseq
  %v85 = vshrl.u32 %v84, 7
  %v86 = vsub.s32 2, %v85
  %v87 = vrot.slane %v63, %v86
  %v88 = vadd.f32 %v80, %v87
  %v89 = vadd.f32 %v81, %v87
  %v90 = vadd.f32 %v82, %v87
  %v91 = vadd.f32 %v83, %v87
  %v92 = vld [vmem:[%s2] sm:$0xff]
  %v93 = vld [vmem:[%s2 + $0x8] sm:$0xff]
  %v94 = vld [vmem:[%s2 + $0x10] sm:$0xff]
  %v95 = vld [vmem:[%s2 + $0x18] sm:$0xff]
  %v96 = vld [vmem:[%s2 + $0x20] sm:$0xff]
  %v97 = vld [vmem:[%s2 + $0x28] sm:$0xff]
  %v98 = vld [vmem:[%s2 + $0x30] sm:$0xff]
  %v99 = vld [vmem:[%s2 + $0x38] sm:$0xff]
  %v100 = vld [vmem:[%s2 + $0x40] sm:$0xff]
  %v101 = vld [vmem:[%s2 + $0x48] sm:$0xff]
  %v102 = vld [vmem:[%s2 + $0x50] sm:$0xff]
  %v103 = vld [vmem:[%s2 + $0x58] sm:$0xff]
  %v104 = vld [vmem:[%s2 + $0x60] sm:$0xff]
  %v105 = vld [vmem:[%s2 + $0x68] sm:$0xff]
  %v106 = vld [vmem:[%s2 + $0x70] sm:$0xff]
  %v107 = vld [vmem:[%s2 + $0x78] sm:$0xff]
  %v108 = vld [vmem:[%s3] sm:$0x1]
  %v110 = vlaneseq
  %v111 = vshrl.u32 %v110, 7
  %v112 = vsub.s32 0, %v111
  %v113 = vrot.slane %v108, %v112
  %115 = vmatprep.subr.mxu0 0.0
  %116 = vmatpush1.msra.mxu0 %v92
  %117 = vmatprep.subr.mxu0 0.0
  %118 = vmatpush1.msra.mxu0 %v93
  %119 = vmatprep.subr.mxu0 0.0
  %120 = vmatpush1.msra.mxu0 %v94
  %121 = vmatprep.subr.mxu0 0.0
  %122 = vmatpush1.msra.mxu0 %v95
  %123 = vmatprep.subr.mxu0 0.0
  %124 = vmatpush1.msra.mxu0 %v96
  %125 = vmatprep.subr.mxu0 0.0
  %126 = vmatpush1.msra.mxu0 %v97
  %127 = vmatprep.subr.mxu0 0.0
  %128 = vmatpush1.msra.mxu0 %v98
  %129 = vmatprep.subr.mxu0 0.0
  %130 = vmatpush1.msra.mxu0 %v99
  %131 = vmatprep.subr.mxu0 0.0
  %132 = vmatpush1.msra.mxu0 %v100
  %133 = vmatprep.subr.mxu0 0.0
  %134 = vmatpush1.msra.mxu0 %v101
  %135 = vmatprep.subr.mxu0 0.0
  %136 = vmatpush1.msra.mxu0 %v102
  %137 = vmatprep.subr.mxu0 0.0
  %138 = vmatpush1.msra.mxu0 %v103
  %139 = vmatprep.subr.mxu0 0.0
  %140 = vmatpush1.msra.mxu0 %v104
  %141 = vmatprep.subr.mxu0 0.0
  %142 = vmatpush1.msra.mxu0 %v105
  %143 = vmatprep.subr.mxu0 0.0
  %144 = vmatpush1.msra.mxu0 %v106
  %145 = vmatprep.subr.mxu0 0.0
  %146 = vmatpush1.msra.mxu0 %v107
  %147 = vmatprep.subr.mxu0 0.0
  %148 = vmatpush1.msra.mxu0 0.0
  %149 = vmatprep.subr.mxu0 0.0
  %150 = vmatpush1.msra.mxu0 0.0
  %151 = vmatprep.subr.mxu0 0.0
  %152 = vmatpush1.msra.mxu0 0.0
  %153 = vmatprep.subr.mxu0 0.0
  %154 = vmatpush1.msra.mxu0 0.0
  %155 = vmatprep.subr.mxu0 0.0
  %156 = vmatpush1.msra.mxu0 0.0
  %157 = vmatprep.subr.mxu0 0.0
  %158 = vmatpush1.msra.mxu0 0.0
  %159 = vmatprep.subr.mxu0 0.0
  %160 = vmatpush1.msra.mxu0 0.0
  %161 = vmatprep.subr.mxu0 0.0
  %162 = vmatpush1.msra.mxu0 0.0
  %163 = vmatprep.subr.mxu0 0.0
  %164 = vmatpush1.msra.mxu0 0.0
  %165 = vmatprep.subr.mxu0 0.0
  %166 = vmatpush1.msra.mxu0 0.0
  %167 = vmatprep.subr.mxu0 0.0
  %168 = vmatpush1.msra.mxu0 0.0
  %169 = vmatprep.subr.mxu0 0.0
  %170 = vmatpush1.msra.mxu0 0.0
  %171 = vmatprep.subr.mxu0 0.0
  %172 = vmatpush1.msra.mxu0 0.0
  %173 = vmatprep.subr.mxu0 0.0
  %174 = vmatpush1.msra.mxu0 0.0
  %175 = vmatprep.subr.mxu0 0.0
  %176 = vmatpush1.msra.mxu0 0.0
  %177 = vmatprep.subr.mxu0 0.0
  %178 = vmatpush1.msra.mxu0 0.0
  %179 = vmatprep.mubr.f32.mxu0 0.0
  %180 = vmatmul.mubr.f32.gmra.mrb[0].mxu0 %v88
  %v181 = vpop.f32.mrb[0].mxu0
  %v182 = vadd.f32 %v113, %v181
  %v183 = vpop.f32.mrb[0].mxu0
  %184 = vmatprep.mubr.f32.mxu0 0.0
  %185 = vmatmul.mubr.f32.gmra.mrb[0].mxu0 %v89
  %v186 = vpop.f32.mrb[0].mxu0
  %v187 = vadd.f32 %v113, %v186
  %v188 = vpop.f32.mrb[0].mxu0
  %189 = vmatprep.mubr.f32.mxu0 0.0
  %190 = vmatmul.mubr.f32.gmra.mrb[0].mxu0 %v90
  %v191 = vpop.f32.mrb[0].mxu0
  %v192 = vadd.f32 %v113, %v191
  %v193 = vpop.f32.mrb[0].mxu0
  %194 = vmatprep.mubr.f32.mxu0 0.0
  %195 = vmatmul.mubr.f32.gmra.mrb[0].mxu0 %v91
  %v196 = vpop.f32.mrb[0].mxu0
  %v197 = vadd.f32 %v113, %v196
  %v198 = vpop.f32.mrb[0].mxu0
  %199 = vdwg.mxu0
  %v200 = vld [vmem:[%s4] sm:$0x7]
  %v201 = vlaneseq
  %v202 = vshrl.u32 %v201, 7
  %v203 = vsub.s32 0, %v202
  %v204 = vrot.slane %v200, %v203
  %v205 = vmul.f32 %v182, %v204
  %v206 = vmul.f32 %v187, %v204
  %v207 = vmul.f32 %v192, %v204
  %v208 = vmul.f32 %v197, %v204
  %v209 = vtanh.pop %v205
  %v210 = vtanh.pop %v206
  %v211 = vtanh.pop %v207
  %v212 = vtanh.pop %v208
  %v213 = vlaneseq
  %v214 = vshrl.u32 %v213, 7
  %v215 = vsub.s32 1, %v214
  %v216 = vrot.slane %v200, %v215
  %v217 = vmul.f32 %v209, %v216
  %v218 = vmul.f32 %v210, %v216
  %v219 = vmul.f32 %v211, %v216
  %v220 = vmul.f32 %v212, %v216
  %v221 = vlaneseq
  %v222 = vshrl.u32 %v221, 7
  %v223 = vsub.s32 2, %v222
  %v224 = vrot.slane %v200, %v223
  %v225 = vadd.f32 %v217, %v224
  %v226 = vadd.f32 %v218, %v224
  %v227 = vadd.f32 %v219, %v224
  %v228 = vadd.f32 %v220, %v224
  %v229 = vld [vmem:[%s5] sm:$0xff]
  %v230 = vld [vmem:[%s5 + $0x8] sm:$0xff]
  %v231 = vld [vmem:[%s5 + $0x10] sm:$0xff]
  %v232 = vld [vmem:[%s5 + $0x18] sm:$0xff]
  %v233 = vld [vmem:[%s5 + $0x20] sm:$0xff]
  %v234 = vld [vmem:[%s5 + $0x28] sm:$0xff]
  %v235 = vld [vmem:[%s5 + $0x30] sm:$0xff]
  %v236 = vld [vmem:[%s5 + $0x38] sm:$0xff]
  %v237 = vld [vmem:[%s6] sm:$0x1]
  %v239 = vlaneseq
  %v240 = vshrl.u32 %v239, 7
  %v241 = vsub.s32 0, %v240
  %v242 = vrot.slane %v237, %v241
  %vm244 = vcmask 523264
  %v246 = vsel %vm244, %v225, 0
  %v249 = vsel %vm244, %v226, 0
  %v252 = vsel %vm244, %v227, 0
  %v255 = vsel %vm244, %v228, 0
  %257 = vmatprep.subr.mxu0 0.0
  %258 = vmatpush1.msra.mxu0 %v229
  %259 = vmatprep.subr.mxu0 0.0
  %260 = vmatpush1.msra.mxu0 %v230
  %261 = vmatprep.subr.mxu0 0.0
  %262 = vmatpush1.msra.mxu0 %v231
  %263 = vmatprep.subr.mxu0 0.0
  %264 = vmatpush1.msra.mxu0 %v232
  %265 = vmatprep.subr.mxu0 0.0
  %266 = vmatpush1.msra.mxu0 %v233
  %267 = vmatprep.subr.mxu0 0.0
  %268 = vmatpush1.msra.mxu0 %v234
  %269 = vmatprep.subr.mxu0 0.0
  %270 = vmatpush1.msra.mxu0 %v235
  %271 = vmatprep.subr.mxu0 0.0
  %272 = vmatpush1.msra.mxu0 %v236
  %273 = vmatprep.subr.mxu0 0.0
  %274 = vmatpush1.msra.mxu0 0.0
  %275 = vmatprep.subr.mxu0 0.0
  %276 = vmatpush1.msra.mxu0 0.0
  %277 = vmatprep.subr.mxu0 0.0
  %278 = vmatpush1.msra.mxu0 0.0
  %279 = vmatprep.subr.mxu0 0.0
  %280 = vmatpush1.msra.mxu0 0.0
  %281 = vmatprep.subr.mxu0 0.0
  %282 = vmatpush1.msra.mxu0 0.0
  %283 = vmatprep.subr.mxu0 0.0
  %284 = vmatpush1.msra.mxu0 0.0
  %285 = vmatprep.subr.mxu0 0.0
  %286 = vmatpush1.msra.mxu0 0.0
  %287 = vmatprep.subr.mxu0 0.0
  %288 = vmatpush1.msra.mxu0 0.0
  %289 = vmatprep.subr.mxu0 0.0
  %290 = vmatpush1.msra.mxu0 0.0
  %291 = vmatprep.subr.mxu0 0.0
  %292 = vmatpush1.msra.mxu0 0.0
  %293 = vmatprep.subr.mxu0 0.0
  %294 = vmatpush1.msra.mxu0 0.0
  %295 = vmatprep.subr.mxu0 0.0
  %296 = vmatpush1.msra.mxu0 0.0
  %297 = vmatprep.subr.mxu0 0.0
  %298 = vmatpush1.msra.mxu0 0.0
  %299 = vmatprep.subr.mxu0 0.0
  %300 = vmatpush1.msra.mxu0 0.0
  %301 = vmatprep.subr.mxu0 0.0
  %302 = vmatpush1.msra.mxu0 0.0
  %303 = vmatprep.subr.mxu0 0.0
  %304 = vmatpush1.msra.mxu0 0.0
  %305 = vmatprep.subr.mxu0 0.0
  %306 = vmatpush1.msra.mxu0 0.0
  %307 = vmatprep.subr.mxu0 0.0
  %308 = vmatpush1.msra.mxu0 0.0
  %309 = vmatprep.subr.mxu0 0.0
  %310 = vmatpush1.msra.mxu0 0.0
  %311 = vmatprep.subr.mxu0 0.0
  %312 = vmatpush1.msra.mxu0 0.0
  %313 = vmatprep.subr.mxu0 0.0
  %314 = vmatpush1.msra.mxu0 0.0
  %315 = vmatprep.subr.mxu0 0.0
  %316 = vmatpush1.msra.mxu0 0.0
  %317 = vmatprep.subr.mxu0 0.0
  %318 = vmatpush1.msra.mxu0 0.0
  %319 = vmatprep.subr.mxu0 0.0
  %320 = vmatpush1.msra.mxu0 0.0
  %321 = vmatprep.mubr.f32.mxu0 0.0
  %322 = vmatmul.mubr.f32.gmra.mrb[0].mxu0 %v246
  %v323 = vpop.f32.mrb[0].mxu0
  %v324 = vadd.f32 %v242, %v323
  %v325 = vpop.f32.mrb[0].mxu0
  %326 = vmatprep.mubr.f32.mxu0 0.0
  %327 = vmatmul.mubr.f32.gmra.mrb[0].mxu0 %v249
  %v328 = vpop.f32.mrb[0].mxu0
  %v329 = vadd.f32 %v242, %v328
  %v330 = vpop.f32.mrb[0].mxu0
  %331 = vmatprep.mubr.f32.mxu0 0.0
  %332 = vmatmul.mubr.f32.gmra.mrb[0].mxu0 %v252
  %v333 = vpop.f32.mrb[0].mxu0
  %v334 = vadd.f32 %v242, %v333
  %v335 = vpop.f32.mrb[0].mxu0
  %336 = vmatprep.mubr.f32.mxu0 0.0
  %337 = vmatmul.mubr.f32.gmra.mrb[0].mxu0 %v255
  %v338 = vpop.f32.mrb[0].mxu0
  %v339 = vadd.f32 %v242, %v338
  %v340 = vpop.f32.mrb[0].mxu0
  %341 = vdwg.mxu0
  %v342 = vld [vmem:[%s7] sm:$0xff]
  %v343 = vld [vmem:[%s7 + $0x8] sm:$0xff]
  %v344 = vld [vmem:[%s7 + $0x10] sm:$0xff]
  %v345 = vld [vmem:[%s7 + $0x18] sm:$0xff]
  %v346 = vld [vmem:[%s7 + $0x20] sm:$0xff]
  %v347 = vld [vmem:[%s7 + $0x28] sm:$0xff]
  %v348 = vld [vmem:[%s7 + $0x30] sm:$0xff]
  %v349 = vld [vmem:[%s7 + $0x38] sm:$0xff]
  %v350 = vld [vmem:[%s7 + $0x40] sm:$0xff]
  %v351 = vld [vmem:[%s7 + $0x48] sm:$0xff]
  %v352 = vld [vmem:[%s7 + $0x50] sm:$0xff]
  %v353 = vld [vmem:[%s7 + $0x58] sm:$0xff]
  %v354 = vld [vmem:[%s7 + $0x60] sm:$0xff]
  %v355 = vld [vmem:[%s7 + $0x68] sm:$0xff]
  %v356 = vld [vmem:[%s7 + $0x70] sm:$0xff]
  %v357 = vld [vmem:[%s7 + $0x78] sm:$0xff]
  %v358 = vld [vmem:[%s8] sm:$0x1]
  %v360 = vlaneseq
  %v361 = vshrl.u32 %v360, 7
  %v362 = vsub.s32 0, %v361
  %v363 = vrot.slane %v358, %v362
  %365 = vmatprep.subr.mxu0 0.0
  %366 = vmatpush1.msra.mxu0 %v342
  %367 = vmatprep.subr.mxu0 0.0
  %368 = vmatpush1.msra.mxu0 %v343
  %369 = vmatprep.subr.mxu0 0.0
  %370 = vmatpush1.msra.mxu0 %v344
  %371 = vmatprep.subr.mxu0 0.0
  %372 = vmatpush1.msra.mxu0 %v345
  %373 = vmatprep.subr.mxu0 0.0
  %374 = vmatpush1.msra.mxu0 %v346
  %375 = vmatprep.subr.mxu0 0.0
  %376 = vmatpush1.msra.mxu0 %v347
  %377 = vmatprep.subr.mxu0 0.0
  %378 = vmatpush1.msra.mxu0 %v348
  %379 = vmatprep.subr.mxu0 0.0
  %380 = vmatpush1.msra.mxu0 %v349
  %381 = vmatprep.subr.mxu0 0.0
  %382 = vmatpush1.msra.mxu0 %v350
  %383 = vmatprep.subr.mxu0 0.0
  %384 = vmatpush1.msra.mxu0 %v351
  %385 = vmatprep.subr.mxu0 0.0
  %386 = vmatpush1.msra.mxu0 %v352
  %387 = vmatprep.subr.mxu0 0.0
  %388 = vmatpush1.msra.mxu0 %v353
  %389 = vmatprep.subr.mxu0 0.0
  %390 = vmatpush1.msra.mxu0 %v354
  %391 = vmatprep.subr.mxu0 0.0
  %392 = vmatpush1.msra.mxu0 %v355
  %393 = vmatprep.subr.mxu0 0.0
  %394 = vmatpush1.msra.mxu0 %v356
  %395 = vmatprep.subr.mxu0 0.0
  %396 = vmatpush1.msra.mxu0 %v357
  %397 = vmatprep.subr.mxu0 0.0
  %398 = vmatpush1.msra.mxu0 0.0
  %399 = vmatprep.subr.mxu0 0.0
  %400 = vmatpush1.msra.mxu0 0.0
  %401 = vmatprep.subr.mxu0 0.0
  %402 = vmatpush1.msra.mxu0 0.0
  %403 = vmatprep.subr.mxu0 0.0
  %404 = vmatpush1.msra.mxu0 0.0
  %405 = vmatprep.subr.mxu0 0.0
  %406 = vmatpush1.msra.mxu0 0.0
  %407 = vmatprep.subr.mxu0 0.0
  %408 = vmatpush1.msra.mxu0 0.0
  %409 = vmatprep.subr.mxu0 0.0
  %410 = vmatpush1.msra.mxu0 0.0
  %411 = vmatprep.subr.mxu0 0.0
  %412 = vmatpush1.msra.mxu0 0.0
  %413 = vmatprep.subr.mxu0 0.0
  %414 = vmatpush1.msra.mxu0 0.0
  %415 = vmatprep.subr.mxu0 0.0
  %416 = vmatpush1.msra.mxu0 0.0
  %417 = vmatprep.subr.mxu0 0.0
  %418 = vmatpush1.msra.mxu0 0.0
  %419 = vmatprep.subr.mxu0 0.0
  %420 = vmatpush1.msra.mxu0 0.0
  %421 = vmatprep.subr.mxu0 0.0
  %422 = vmatpush1.msra.mxu0 0.0
  %423 = vmatprep.subr.mxu0 0.0
  %424 = vmatpush1.msra.mxu0 0.0
  %425 = vmatprep.subr.mxu0 0.0
  %426 = vmatpush1.msra.mxu0 0.0
  %427 = vmatprep.subr.mxu0 0.0
  %428 = vmatpush1.msra.mxu0 0.0
  %429 = vmatprep.mubr.f32.mxu0 0.0
  %430 = vmatmul.mubr.f32.gmra.mrb[0].mxu0 %v88
  %v431 = vpop.f32.mrb[0].mxu0
  %v432 = vadd.f32 %v363, %v431
  %v433 = vpop.f32.mrb[0].mxu0
  %434 = vmatprep.mubr.f32.mxu0 0.0
  %435 = vmatmul.mubr.f32.gmra.mrb[0].mxu0 %v89
  %v436 = vpop.f32.mrb[0].mxu0
  %v437 = vadd.f32 %v363, %v436
  %v438 = vpop.f32.mrb[0].mxu0
  %439 = vmatprep.mubr.f32.mxu0 0.0
  %440 = vmatmul.mubr.f32.gmra.mrb[0].mxu0 %v90
  %v441 = vpop.f32.mrb[0].mxu0
  %v442 = vadd.f32 %v363, %v441
  %v443 = vpop.f32.mrb[0].mxu0
  %444 = vmatprep.mubr.f32.mxu0 0.0
  %445 = vmatmul.mubr.f32.gmra.mrb[0].mxu0 %v91
  %v446 = vpop.f32.mrb[0].mxu0
  %v447 = vadd.f32 %v363, %v446
  %v448 = vpop.f32.mrb[0].mxu0
  %449 = vdwg.mxu0
  %v450 = vld [vmem:[%s9] sm:$0x7]
  %v451 = vlaneseq
  %v452 = vshrl.u32 %v451, 7
  %v453 = vsub.s32 0, %v452
  %v454 = vrot.slane %v450, %v453
  %v455 = vmul.f32 %v432, %v454
  %v456 = vmul.f32 %v437, %v454
  %v457 = vmul.f32 %v442, %v454
  %v458 = vmul.f32 %v447, %v454
  %v459 = vtanh.pop %v455
  %v460 = vtanh.pop %v456
  %v461 = vtanh.pop %v457
  %v462 = vtanh.pop %v458
  %v463 = vlaneseq
  %v464 = vshrl.u32 %v463, 7
  %v465 = vsub.s32 1, %v464
  %v466 = vrot.slane %v450, %v465
  %v467 = vmul.f32 %v459, %v466
  %v468 = vmul.f32 %v460, %v466
  %v469 = vmul.f32 %v461, %v466
  %v470 = vmul.f32 %v462, %v466
  %v471 = vlaneseq
  %v472 = vshrl.u32 %v471, 7
  %v473 = vsub.s32 2, %v472
  %v474 = vrot.slane %v450, %v473
  %v475 = vadd.f32 %v467, %v474
  %v476 = vadd.f32 %v468, %v474
  %v477 = vadd.f32 %v469, %v474
  %v478 = vadd.f32 %v470, %v474
  %v479 = vld [vmem:[%s10] sm:$0xff]
  %v480 = vld [vmem:[%s10 + $0x8] sm:$0xff]
  %v481 = vld [vmem:[%s10 + $0x10] sm:$0xff]
  %v482 = vld [vmem:[%s10 + $0x18] sm:$0xff]
  %v483 = vld [vmem:[%s10 + $0x20] sm:$0xff]
  %v484 = vld [vmem:[%s10 + $0x28] sm:$0xff]
  %v485 = vld [vmem:[%s10 + $0x30] sm:$0xff]
  %v486 = vld [vmem:[%s10 + $0x38] sm:$0xff]
  %v487 = vld [vmem:[%s10 + $0x40] sm:$0xff]
  %v488 = vld [vmem:[%s10 + $0x48] sm:$0xff]
  %v489 = vld [vmem:[%s10 + $0x50] sm:$0xff]
  %v490 = vld [vmem:[%s10 + $0x58] sm:$0xff]
  %v491 = vld [vmem:[%s10 + $0x60] sm:$0xff]
  %v492 = vld [vmem:[%s10 + $0x68] sm:$0xff]
  %v493 = vld [vmem:[%s10 + $0x70] sm:$0xff]
  %v494 = vld [vmem:[%s10 + $0x78] sm:$0xff]
  %v495 = vld [vmem:[%s11] sm:$0x3]
  %v497 = vlaneseq
  %v498 = vshrl.u32 %v497, 7
  %v499 = vsub.s32 0, %v498
  %v500 = vrot.slane %v495, %v499
  %v501 = vlaneseq
  %v502 = vshrl.u32 %v501, 7
  %v503 = vsub.s32 1, %v502
  %v504 = vrot.slane %v495, %v503
  %v508 = vsel %vm244, %v475, 0
  %v511 = vsel %vm244, %v476, 0
  %v514 = vsel %vm244, %v477, 0
  %v517 = vsel %vm244, %v478, 0
  %519 = vmatprep.subr.mxu0 %v480
  %520 = vmatpush1.msra.mxu0 %v479
  %521 = vmatprep.subr.mxu0 %v482
  %522 = vmatpush1.msra.mxu0 %v481
  %523 = vmatprep.subr.mxu0 %v484
  %524 = vmatpush1.msra.mxu0 %v483
  %525 = vmatprep.subr.mxu0 %v486
  %526 = vmatpush1.msra.mxu0 %v485
  %527 = vmatprep.subr.mxu0 %v488
  %528 = vmatpush1.msra.mxu0 %v487
  %529 = vmatprep.subr.mxu0 %v490
  %530 = vmatpush1.msra.mxu0 %v489
  %531 = vmatprep.subr.mxu0 %v492
  %532 = vmatpush1.msra.mxu0 %v491
  %533 = vmatprep.subr.mxu0 %v494
  %534 = vmatpush1.msra.mxu0 %v493
  %535 = vmatprep.subr.mxu0 0.0
  %536 = vmatpush1.msra.mxu0 0.0
  %537 = vmatprep.subr.mxu0 0.0
  %538 = vmatpush1.msra.mxu0 0.0
  %539 = vmatprep.subr.mxu0 0.0
  %540 = vmatpush1.msra.mxu0 0.0
  %541 = vmatprep.subr.mxu0 0.0
  %542 = vmatpush1.msra.mxu0 0.0
  %543 = vmatprep.subr.mxu0 0.0
  %544 = vmatpush1.msra.mxu0 0.0
  %545 = vmatprep.subr.mxu0 0.0
  %546 = vmatpush1.msra.mxu0 0.0
  %547 = vmatprep.subr.mxu0 0.0
  %548 = vmatpush1.msra.mxu0 0.0
  %549 = vmatprep.subr.mxu0 0.0
  %550 = vmatpush1.msra.mxu0 0.0
  %551 = vmatprep.subr.mxu0 0.0
  %552 = vmatpush1.msra.mxu0 0.0
  %553 = vmatprep.subr.mxu0 0.0
  %554 = vmatpush1.msra.mxu0 0.0
  %555 = vmatprep.subr.mxu0 0.0
  %556 = vmatpush1.msra.mxu0 0.0
  %557 = vmatprep.subr.mxu0 0.0
  %558 = vmatpush1.msra.mxu0 0.0
  %559 = vmatprep.subr.mxu0 0.0
  %560 = vmatpush1.msra.mxu0 0.0
  %561 = vmatprep.subr.mxu0 0.0
  %562 = vmatpush1.msra.mxu0 0.0
  %563 = vmatprep.subr.mxu0 0.0
  %564 = vmatpush1.msra.mxu0 0.0
  %565 = vmatprep.subr.mxu0 0.0
  %566 = vmatpush1.msra.mxu0 0.0
  %567 = vmatprep.subr.mxu0 0.0
  %568 = vmatpush1.msra.mxu0 0.0
  %569 = vmatprep.subr.mxu0 0.0
  %570 = vmatpush1.msra.mxu0 0.0
  %571 = vmatprep.subr.mxu0 0.0
  %572 = vmatpush1.msra.mxu0 0.0
  %573 = vmatprep.subr.mxu0 0.0
  %574 = vmatpush1.msra.mxu0 0.0
  %575 = vmatprep.subr.mxu0 0.0
  %576 = vmatpush1.msra.mxu0 0.0
  %577 = vmatprep.subr.mxu0 0.0
  %578 = vmatpush1.msra.mxu0 0.0
  %579 = vmatprep.subr.mxu0 0.0
  %580 = vmatpush1.msra.mxu0 0.0
  %581 = vmatprep.subr.mxu0 0.0
  %582 = vmatpush1.msra.mxu0 0.0
  %583 = vmatprep.mubr.f32.mxu0 0.0
  %584 = vmatmul.mubr.f32.gmra.mrb[0].mxu0 %v508
  %v585 = vpop.f32.mrb[0].mxu0
  %v586 = vadd.f32 %v500, %v585
  %v587 = vpop.f32.mrb[0].mxu0
  %v588 = vadd.f32 %v504, %v587
  %589 = vmatprep.mubr.f32.mxu0 0.0
  %590 = vmatmul.mubr.f32.gmra.mrb[0].mxu0 %v511
  %v591 = vpop.f32.mrb[0].mxu0
  %v592 = vadd.f32 %v500, %v591
  %v593 = vpop.f32.mrb[0].mxu0
  %v594 = vadd.f32 %v504, %v593
  %595 = vmatprep.mubr.f32.mxu0 0.0
  %596 = vmatmul.mubr.f32.gmra.mrb[0].mxu0 %v514
  %v597 = vpop.f32.mrb[0].mxu0
  %v598 = vadd.f32 %v500, %v597
  %v599 = vpop.f32.mrb[0].mxu0
  %v600 = vadd.f32 %v504, %v599
  %601 = vmatprep.mubr.f32.mxu0 0.0
  %602 = vmatmul.mubr.f32.gmra.mrb[0].mxu0 %v517
  %v603 = vpop.f32.mrb[0].mxu0
  %v604 = vadd.f32 %v500, %v603
  %v605 = vpop.f32.mrb[0].mxu0
  %v606 = vadd.f32 %v504, %v605
  %607 = vdwg.mxu0
  %v608 = vld [vmem:[%s14] sm:$0xff]
  %v609 = vld [vmem:[%s14 + $0x8] sm:$0xff]
  %v610 = vld [vmem:[%s14 + $0x10] sm:$0xff]
  %v611 = vld [vmem:[%s14 + $0x18] sm:$0xff]
  %v612 = vld [vmem:[%s15] sm:$0xff]
  %v613 = vld [vmem:[%s15 + $0x8] sm:$0xff]
  %v614 = vld [vmem:[%s15 + $0x10] sm:$0xff]
  %v615 = vld [vmem:[%s15 + $0x18] sm:$0xff]
  %v616 = vld [vmem:[%s16] sm:$0xff]
  %v617 = vld [vmem:[%s16 + $0x8] sm:$0xff]
  %v618 = vld [vmem:[%s16 + $0x10] sm:$0xff]
  %v619 = vld [vmem:[%s16 + $0x18] sm:$0xff]
  %v620 = vld [vmem:[%s16 + $0x20] sm:$0xff]
  %v621 = vld [vmem:[%s16 + $0x28] sm:$0xff]
  %v622 = vld [vmem:[%s16 + $0x30] sm:$0xff]
  %v623 = vld [vmem:[%s16 + $0x38] sm:$0xff]
  %628 = vrot.lane.b32.xlu0 %v608, 64
  %v629 = vpop.permute.xlu0 %628
  %630 = vrot.lane.b32.xlu0 %v609, 64
  %v631 = vpop.permute.xlu0 %630
  %632 = vrot.lane.b32.xlu0 %v610, 64
  %v633 = vpop.permute.xlu0 %632
  %634 = vrot.lane.b32.xlu0 %v611, 64
  %v635 = vpop.permute.xlu0 %634
  %v640 = vmul.f32 %v432, %v629
  %v641 = vmul.f32 %v437, %v631
  %v642 = vmul.f32 %v442, %v633
  %v643 = vmul.f32 %v447, %v635
  %648 = vrot.lane.b32.xlu0 %v432, 64
  %v649 = vpop.permute.xlu0 %648
  %650 = vrot.lane.b32.xlu0 %v437, 64
  %v651 = vpop.permute.xlu0 %650
  %652 = vrot.lane.b32.xlu0 %v442, 64
  %v653 = vpop.permute.xlu0 %652
  %654 = vrot.lane.b32.xlu0 %v447, 64
  %v655 = vpop.permute.xlu0 %654
  %v656 = vsel %vm244, %v649, 0
  %v658 = vsel %vm244, %v651, 0
  %v660 = vsel %vm244, %v653, 0
  %v662 = vsel %vm244, %v655, 0
  %664 = vmatprep.subr.mxu0 0.0
  %665 = vmatpush1.msra.mxu0 %v616
  %666 = vmatprep.subr.mxu0 0.0
  %667 = vmatpush1.msra.mxu0 %v617
  %668 = vmatprep.subr.mxu0 0.0
  %669 = vmatpush1.msra.mxu0 %v618
  %670 = vmatprep.subr.mxu0 0.0
  %671 = vmatpush1.msra.mxu0 %v619
  %672 = vmatprep.subr.mxu0 0.0
  %673 = vmatpush1.msra.mxu0 %v620
  %674 = vmatprep.subr.mxu0 0.0
  %675 = vmatpush1.msra.mxu0 %v621
  %676 = vmatprep.subr.mxu0 0.0
  %677 = vmatpush1.msra.mxu0 %v622
  %678 = vmatprep.subr.mxu0 0.0
  %679 = vmatpush1.msra.mxu0 %v623
  %680 = vmatprep.subr.mxu0 0.0
  %681 = vmatpush1.msra.mxu0 0.0
  %682 = vmatprep.subr.mxu0 0.0
  %683 = vmatpush1.msra.mxu0 0.0
  %684 = vmatprep.subr.mxu0 0.0
  %685 = vmatpush1.msra.mxu0 0.0
  %686 = vmatprep.subr.mxu0 0.0
  %687 = vmatpush1.msra.mxu0 0.0
  %688 = vmatprep.subr.mxu0 0.0
  %689 = vmatpush1.msra.mxu0 0.0
  %690 = vmatprep.subr.mxu0 0.0
  %691 = vmatpush1.msra.mxu0 0.0
  %692 = vmatprep.subr.mxu0 0.0
  %693 = vmatpush1.msra.mxu0 0.0
  %694 = vmatprep.subr.mxu0 0.0
  %695 = vmatpush1.msra.mxu0 0.0
  %696 = vmatprep.subr.mxu0 0.0
  %697 = vmatpush1.msra.mxu0 0.0
  %698 = vmatprep.subr.mxu0 0.0
  %699 = vmatpush1.msra.mxu0 0.0
  %700 = vmatprep.subr.mxu0 0.0
  %701 = vmatpush1.msra.mxu0 0.0
  %702 = vmatprep.subr.mxu0 0.0
  %703 = vmatpush1.msra.mxu0 0.0
  %704 = vmatprep.subr.mxu0 0.0
  %705 = vmatpush1.msra.mxu0 0.0
  %706 = vmatprep.subr.mxu0 0.0
  %707 = vmatpush1.msra.mxu0 0.0
  %708 = vmatprep.subr.mxu0 0.0
  %709 = vmatpush1.msra.mxu0 0.0
  %710 = vmatprep.subr.mxu0 0.0
  %711 = vmatpush1.msra.mxu0 0.0
  %712 = vmatprep.subr.mxu0 0.0
  %713 = vmatpush1.msra.mxu0 0.0
  %714 = vmatprep.subr.mxu0 0.0
  %715 = vmatpush1.msra.mxu0 0.0
  %716 = vmatprep.subr.mxu0 0.0
  %717 = vmatpush1.msra.mxu0 0.0
  %718 = vmatprep.subr.mxu0 0.0
  %719 = vmatpush1.msra.mxu0 0.0
  %720 = vmatprep.subr.mxu0 0.0
  %721 = vmatpush1.msra.mxu0 0.0
  %722 = vmatprep.subr.mxu0 0.0
  %723 = vmatpush1.msra.mxu0 0.0
  %724 = vmatprep.subr.mxu0 0.0
  %725 = vmatpush1.msra.mxu0 0.0
  %726 = vmatprep.subr.mxu0 0.0
  %727 = vmatpush1.msra.mxu0 0.0
  %728 = vmatprep.mubr.f32.mxu0 0.0
  %729 = vmatmul.mubr.f32.gmra.mrb[0].mxu0 %v656
  %v730 = vpop.f32.mrb[0].mxu0
  %v731 = vadd.f32 0.0, %v730
  %v732 = vpop.f32.mrb[0].mxu0
  %733 = vmatprep.mubr.f32.mxu0 0.0
  %734 = vmatmul.mubr.f32.gmra.mrb[0].mxu0 %v658
  %v735 = vpop.f32.mrb[0].mxu0
  %v736 = vadd.f32 0.0, %v735
  %v737 = vpop.f32.mrb[0].mxu0
  %738 = vmatprep.mubr.f32.mxu0 0.0
  %739 = vmatmul.mubr.f32.gmra.mrb[0].mxu0 %v660
  %v740 = vpop.f32.mrb[0].mxu0
  %v741 = vadd.f32 0.0, %v740
  %v742 = vpop.f32.mrb[0].mxu0
  %743 = vmatprep.mubr.f32.mxu0 0.0
  %744 = vmatmul.mubr.f32.gmra.mrb[0].mxu0 %v662
  %v745 = vpop.f32.mrb[0].mxu0
  %v746 = vadd.f32 0.0, %v745
  %v747 = vpop.f32.mrb[0].mxu0
  %748 = vdwg.mxu0
  %v749 = vmul.f32 %v731, %v612
  %v750 = vmul.f32 %v736, %v613
  %v751 = vmul.f32 %v741, %v614
  %v752 = vmul.f32 %v746, %v615
  %757 = vrot.lane.b32.xlu0 %v749, 64
  %v758 = vpop.permute.xlu0 %757
  %759 = vrot.lane.b32.xlu0 %v750, 64
  %v760 = vpop.permute.xlu0 %759
  %761 = vrot.lane.b32.xlu0 %v751, 64
  %v762 = vpop.permute.xlu0 %761
  %763 = vrot.lane.b32.xlu0 %v752, 64
  %v764 = vpop.permute.xlu0 %763
  %v769 = vadd.f32 %v640, %v758
  %v770 = vadd.f32 %v641, %v760
  %v771 = vadd.f32 %v642, %v762
  %v772 = vadd.f32 %v643, %v764
  %v773 = vld [vmem:[%s17] sm:$0xff]
  %v774 = vld [vmem:[%s17 + $0x8] sm:$0xff]
  %v775 = vld [vmem:[%s17 + $0x10] sm:$0xff]
  %v776 = vld [vmem:[%s17 + $0x18] sm:$0xff]
  %v777 = vmul.f32 %v324, %v629
  %v778 = vmul.f32 %v329, %v631
  %v779 = vmul.f32 %v334, %v633
  %v780 = vmul.f32 %v339, %v635
  %785 = vrot.lane.b32.xlu0 %v324, 64
  %v786 = vpop.permute.xlu0 %785
  %787 = vrot.lane.b32.xlu0 %v329, 64
  %v788 = vpop.permute.xlu0 %787
  %789 = vrot.lane.b32.xlu0 %v334, 64
  %v790 = vpop.permute.xlu0 %789
  %791 = vrot.lane.b32.xlu0 %v339, 64
  %v792 = vpop.permute.xlu0 %791
  %v793 = vsel %vm244, %v786, 0
  %v795 = vsel %vm244, %v788, 0
  %v797 = vsel %vm244, %v790, 0
  %v799 = vsel %vm244, %v792, 0
  %801 = vmatprep.subr.mxu0 0.0
  %802 = vmatpush1.msra.mxu0 %v616
  %803 = vmatprep.subr.mxu0 0.0
  %804 = vmatpush1.msra.mxu0 %v617
  %805 = vmatprep.subr.mxu0 0.0
  %806 = vmatpush1.msra.mxu0 %v618
  %807 = vmatprep.subr.mxu0 0.0
  %808 = vmatpush1.msra.mxu0 %v619
  %809 = vmatprep.subr.mxu0 0.0
  %810 = vmatpush1.msra.mxu0 %v620
  %811 = vmatprep.subr.mxu0 0.0
  %812 = vmatpush1.msra.mxu0 %v621
  %813 = vmatprep.subr.mxu0 0.0
  %814 = vmatpush1.msra.mxu0 %v622
  %815 = vmatprep.subr.mxu0 0.0
  %816 = vmatpush1.msra.mxu0 %v623
  %817 = vmatprep.subr.mxu0 0.0
  %818 = vmatpush1.msra.mxu0 0.0
  %819 = vmatprep.subr.mxu0 0.0
  %820 = vmatpush1.msra.mxu0 0.0
  %821 = vmatprep.subr.mxu0 0.0
  %822 = vmatpush1.msra.mxu0 0.0
  %823 = vmatprep.subr.mxu0 0.0
  %824 = vmatpush1.msra.mxu0 0.0
  %825 = vmatprep.subr.mxu0 0.0
  %826 = vmatpush1.msra.mxu0 0.0
  %827 = vmatprep.subr.mxu0 0.0
  %828 = vmatpush1.msra.mxu0 0.0
  %829 = vmatprep.subr.mxu0 0.0
  %830 = vmatpush1.msra.mxu0 0.0
  %831 = vmatprep.subr.mxu0 0.0
  %832 = vmatpush1.msra.mxu0 0.0
  %833 = vmatprep.subr.mxu0 0.0
  %834 = vmatpush1.msra.mxu0 0.0
  %835 = vmatprep.subr.mxu0 0.0
  %836 = vmatpush1.msra.mxu0 0.0
  %837 = vmatprep.subr.mxu0 0.0
  %838 = vmatpush1.msra.mxu0 0.0
  %839 = vmatprep.subr.mxu0 0.0
  %840 = vmatpush1.msra.mxu0 0.0
  %841 = vmatprep.subr.mxu0 0.0
  %842 = vmatpush1.msra.mxu0 0.0
  %843 = vmatprep.subr.mxu0 0.0
  %844 = vmatpush1.msra.mxu0 0.0
  %845 = vmatprep.subr.mxu0 0.0
  %846 = vmatpush1.msra.mxu0 0.0
  %847 = vmatprep.subr.mxu0 0.0
  %848 = vmatpush1.msra.mxu0 0.0
  %849 = vmatprep.subr.mxu0 0.0
  %850 = vmatpush1.msra.mxu0 0.0
  %851 = vmatprep.subr.mxu0 0.0
  %852 = vmatpush1.msra.mxu0 0.0
  %853 = vmatprep.subr.mxu0 0.0
  %854 = vmatpush1.msra.mxu0 0.0
  %855 = vmatprep.subr.mxu0 0.0
  %856 = vmatpush1.msra.mxu0 0.0
  %857 = vmatprep.subr.mxu0 0.0
  %858 = vmatpush1.msra.mxu0 0.0
  %859 = vmatprep.subr.mxu0 0.0
  %860 = vmatpush1.msra.mxu0 0.0
  %861 = vmatprep.subr.mxu0 0.0
  %862 = vmatpush1.msra.mxu0 0.0
  %863 = vmatprep.subr.mxu0 0.0
  %864 = vmatpush1.msra.mxu0 0.0
  %865 = vmatprep.mubr.f32.mxu0 0.0
  %866 = vmatmul.mubr.f32.gmra.mrb[0].mxu0 %v793
  %v867 = vpop.f32.mrb[0].mxu0
  %v868 = vadd.f32 0.0, %v867
  %v869 = vpop.f32.mrb[0].mxu0
  %870 = vmatprep.mubr.f32.mxu0 0.0
  %871 = vmatmul.mubr.f32.gmra.mrb[0].mxu0 %v795
  %v872 = vpop.f32.mrb[0].mxu0
  %v873 = vadd.f32 0.0, %v872
  %v874 = vpop.f32.mrb[0].mxu0
  %875 = vmatprep.mubr.f32.mxu0 0.0
  %876 = vmatmul.mubr.f32.gmra.mrb[0].mxu0 %v797
  %v877 = vpop.f32.mrb[0].mxu0
  %v878 = vadd.f32 0.0, %v877
  %v879 = vpop.f32.mrb[0].mxu0
  %880 = vmatprep.mubr.f32.mxu0 0.0
  %881 = vmatmul.mubr.f32.gmra.mrb[0].mxu0 %v799
  %v882 = vpop.f32.mrb[0].mxu0
  %v883 = vadd.f32 0.0, %v882
  %v884 = vpop.f32.mrb[0].mxu0
  %885 = vdwg.mxu0
  %v886 = vmul.f32 %v868, %v612
  %v887 = vmul.f32 %v873, %v613
  %v888 = vmul.f32 %v878, %v614
  %v889 = vmul.f32 %v883, %v615
  %894 = vrot.lane.b32.xlu0 %v886, 64
  %v895 = vpop.permute.xlu0 %894
  %896 = vrot.lane.b32.xlu0 %v887, 64
  %v897 = vpop.permute.xlu0 %896
  %898 = vrot.lane.b32.xlu0 %v888, 64
  %v899 = vpop.permute.xlu0 %898
  %900 = vrot.lane.b32.xlu0 %v889, 64
  %v901 = vpop.permute.xlu0 %900
  %v906 = vadd.f32 %v777, %v895
  %v907 = vadd.f32 %v778, %v897
  %v908 = vadd.f32 %v779, %v899
  %v909 = vadd.f32 %v780, %v901
  %914 = vrot.lane.b32.xlu0 %v906, 64
  %v915 = vpop.permute.xlu0 %914
  %916 = vrot.lane.b32.xlu0 %v907, 64
  %v917 = vpop.permute.xlu0 %916
  %918 = vrot.lane.b32.xlu0 %v908, 64
  %v919 = vpop.permute.xlu0 %918
  %920 = vrot.lane.b32.xlu0 %v909, 64
  %v921 = vpop.permute.xlu0 %920
  %926 = vrot.lane.b32.xlu0 %v769, 64
  %v927 = vpop.permute.xlu0 %926
  %928 = vrot.lane.b32.xlu0 %v770, 64
  %v929 = vpop.permute.xlu0 %928
  %930 = vrot.lane.b32.xlu0 %v771, 64
  %v931 = vpop.permute.xlu0 %930
  %932 = vrot.lane.b32.xlu0 %v772, 64
  %v933 = vpop.permute.xlu0 %932
  %v934 = vsel %vm244, %v915, 0
  %v936 = vsel %vm244, %v917, 0
  %v938 = vsel %vm244, %v919, 0
  %v940 = vsel %vm244, %v921, 0
  %v942 = vsel %vm244, %v927, 0
  %v944 = vsel %vm244, %v929, 0
  %v946 = vsel %vm244, %v931, 0
  %v948 = vsel %vm244, %v933, 0
  %950 = vmatprep.subr.mxu0 0.0
  %951 = vmatpush1.xpose.msra.mxu0 %v942
  %952 = vmatprep.subr.mxu0 0.0
  %953 = vmatpush1.xpose.msra.mxu0 %v944
  %954 = vmatprep.subr.mxu0 0.0
  %955 = vmatpush1.xpose.msra.mxu0 %v946
  %956 = vmatprep.subr.mxu0 0.0
  %957 = vmatpush1.xpose.msra.mxu0 %v948
  %958 = vmatprep.subr.mxu0 0.0
  %959 = vmatpush1.xpose.msra.mxu0 0.0
  %960 = vmatprep.subr.mxu0 0.0
  %961 = vmatpush1.xpose.msra.mxu0 0.0
  %962 = vmatprep.subr.mxu0 0.0
  %963 = vmatpush1.xpose.msra.mxu0 0.0
  %964 = vmatprep.subr.mxu0 0.0
  %965 = vmatpush1.xpose.msra.mxu0 0.0
  %966 = vmatprep.subr.mxu0 0.0
  %967 = vmatpush1.xpose.msra.mxu0 0.0
  %968 = vmatprep.subr.mxu0 0.0
  %969 = vmatpush1.xpose.msra.mxu0 0.0
  %970 = vmatprep.subr.mxu0 0.0
  %971 = vmatpush1.xpose.msra.mxu0 0.0
  %972 = vmatprep.subr.mxu0 0.0
  %973 = vmatpush1.xpose.msra.mxu0 0.0
  %974 = vmatprep.subr.mxu0 0.0
  %975 = vmatpush1.xpose.msra.mxu0 0.0
  %976 = vmatprep.subr.mxu0 0.0
  %977 = vmatpush1.xpose.msra.mxu0 0.0
  %978 = vmatprep.subr.mxu0 0.0
  %979 = vmatpush1.xpose.msra.mxu0 0.0
  %980 = vmatprep.subr.mxu0 0.0
  %981 = vmatpush1.xpose.msra.mxu0 0.0
  %982 = vmatprep.subr.mxu0 0.0
  %983 = vmatpush1.xpose.msra.mxu0 0.0
  %984 = vmatprep.subr.mxu0 0.0
  %985 = vmatpush1.xpose.msra.mxu0 0.0
  %986 = vmatprep.subr.mxu0 0.0
  %987 = vmatpush1.xpose.msra.mxu0 0.0
  %988 = vmatprep.subr.mxu0 0.0
  %989 = vmatpush1.xpose.msra.mxu0 0.0
  %990 = vmatprep.subr.mxu0 0.0
  %991 = vmatpush1.xpose.msra.mxu0 0.0
  %992 = vmatprep.subr.mxu0 0.0
  %993 = vmatpush1.xpose.msra.mxu0 0.0
  %994 = vmatprep.subr.mxu0 0.0
  %995 = vmatpush1.xpose.msra.mxu0 0.0
  %996 = vmatprep.subr.mxu0 0.0
  %997 = vmatpush1.xpose.msra.mxu0 0.0
  %998 = vmatprep.subr.mxu0 0.0
  %999 = vmatpush1.xpose.msra.mxu0 0.0
  %1000 = vmatprep.subr.mxu0 0.0
  %1001 = vmatpush1.xpose.msra.mxu0 0.0
  %1002 = vmatprep.subr.mxu0 0.0
  %1003 = vmatpush1.xpose.msra.mxu0 0.0
  %1004 = vmatprep.subr.mxu0 0.0
  %1005 = vmatpush1.xpose.msra.mxu0 0.0
  %1006 = vmatprep.subr.mxu0 0.0
  %1007 = vmatpush1.xpose.msra.mxu0 0.0
  %1008 = vmatprep.subr.mxu0 0.0
  %1009 = vmatpush1.xpose.msra.mxu0 0.0
  %1010 = vmatprep.subr.mxu0 0.0
  %1011 = vmatpush1.xpose.msra.mxu0 0.0
  %1012 = vmatprep.subr.mxu0 0.0
  %1013 = vmatpush1.xpose.msra.mxu0 0.0
  %1014 = vmatprep.mubr.f32.mxu0 0.0
  %1015 = vmatmul.mubr.f32.gmra.mrb[0].mxu0 %v934
  %v1016 = vpop.f32.mrb[0].mxu0
  %v1017 = vadd.f32 0.0, %v1016
  %v1018 = vpop.f32.mrb[0].mxu0
  %1019 = vmatprep.mubr.f32.mxu0 0.0
  %1020 = vmatmul.mubr.f32.gmra.mrb[0].mxu0 %v936
  %v1021 = vpop.f32.mrb[0].mxu0
  %v1022 = vadd.f32 0.0, %v1021
  %v1023 = vpop.f32.mrb[0].mxu0
  %1024 = vmatprep.mubr.f32.mxu0 0.0
  %1025 = vmatmul.mubr.f32.gmra.mrb[0].mxu0 %v938
  %v1026 = vpop.f32.mrb[0].mxu0
  %v1027 = vadd.f32 0.0, %v1026
  %v1028 = vpop.f32.mrb[0].mxu0
  %1029 = vmatprep.mubr.f32.mxu0 0.0
  %1030 = vmatmul.mubr.f32.gmra.mrb[0].mxu0 %v940
  %v1031 = vpop.f32.mrb[0].mxu0
  %v1032 = vadd.f32 0.0, %v1031
  %v1033 = vpop.f32.mrb[0].mxu0
  %1034 = vdwg.mxu0
  %v1035 = vsel %vm244, %v324, 0
  %v1037 = vsel %vm244, %v329, 0
  %v1039 = vsel %vm244, %v334, 0
  %v1041 = vsel %vm244, %v339, 0
  %v1044 = vsel %vm244, %v586, 0
  %v1047 = vsel %vm244, %v592, 0
  %v1050 = vsel %vm244, %v598, 0
  %v1053 = vsel %vm244, %v604, 0
  %1055 = vmatprep.subr.mxu0 0.0
  %1056 = vmatpush1.xpose.msra.mxu0 %v1044
  %1057 = vmatprep.subr.mxu0 0.0
  %1058 = vmatpush1.xpose.msra.mxu0 %v1047
  %1059 = vmatprep.subr.mxu0 0.0
  %1060 = vmatpush1.xpose.msra.mxu0 %v1050
  %1061 = vmatprep.subr.mxu0 0.0
  %1062 = vmatpush1.xpose.msra.mxu0 %v1053
  %1063 = vmatprep.subr.mxu0 0.0
  %1064 = vmatpush1.xpose.msra.mxu0 0.0
  %1065 = vmatprep.subr.mxu0 0.0
  %1066 = vmatpush1.xpose.msra.mxu0 0.0
  %1067 = vmatprep.subr.mxu0 0.0
  %1068 = vmatpush1.xpose.msra.mxu0 0.0
  %1069 = vmatprep.subr.mxu0 0.0
  %1070 = vmatpush1.xpose.msra.mxu0 0.0
  %1071 = vmatprep.subr.mxu0 0.0
  %1072 = vmatpush1.xpose.msra.mxu0 0.0
  %1073 = vmatprep.subr.mxu0 0.0
  %1074 = vmatpush1.xpose.msra.mxu0 0.0
  %1075 = vmatprep.subr.mxu0 0.0
  %1076 = vmatpush1.xpose.msra.mxu0 0.0
  %1077 = vmatprep.subr.mxu0 0.0
  %1078 = vmatpush1.xpose.msra.mxu0 0.0
  %1079 = vmatprep.subr.mxu0 0.0
  %1080 = vmatpush1.xpose.msra.mxu0 0.0
  %1081 = vmatprep.subr.mxu0 0.0
  %1082 = vmatpush1.xpose.msra.mxu0 0.0
  %1083 = vmatprep.subr.mxu0 0.0
  %1084 = vmatpush1.xpose.msra.mxu0 0.0
  %1085 = vmatprep.subr.mxu0 0.0
  %1086 = vmatpush1.xpose.msra.mxu0 0.0
  %1087 = vmatprep.subr.mxu0 0.0
  %1088 = vmatpush1.xpose.msra.mxu0 0.0
  %1089 = vmatprep.subr.mxu0 0.0
  %1090 = vmatpush1.xpose.msra.mxu0 0.0
  %1091 = vmatprep.subr.mxu0 0.0
  %1092 = vmatpush1.xpose.msra.mxu0 0.0
  %1093 = vmatprep.subr.mxu0 0.0
  %1094 = vmatpush1.xpose.msra.mxu0 0.0
  %1095 = vmatprep.subr.mxu0 0.0
  %1096 = vmatpush1.xpose.msra.mxu0 0.0
  %1097 = vmatprep.subr.mxu0 0.0
  %1098 = vmatpush1.xpose.msra.mxu0 0.0
  %1099 = vmatprep.subr.mxu0 0.0
  %1100 = vmatpush1.xpose.msra.mxu0 0.0
  %1101 = vmatprep.subr.mxu0 0.0
  %1102 = vmatpush1.xpose.msra.mxu0 0.0
  %1103 = vmatprep.subr.mxu0 0.0
  %1104 = vmatpush1.xpose.msra.mxu0 0.0
  %1105 = vmatprep.subr.mxu0 0.0
  %1106 = vmatpush1.xpose.msra.mxu0 0.0
  %1107 = vmatprep.subr.mxu0 0.0
  %1108 = vmatpush1.xpose.msra.mxu0 0.0
  %1109 = vmatprep.subr.mxu0 0.0
  %1110 = vmatpush1.xpose.msra.mxu0 0.0
  %1111 = vmatprep.subr.mxu0 0.0
  %1112 = vmatpush1.xpose.msra.mxu0 0.0
  %1113 = vmatprep.subr.mxu0 0.0
  %1114 = vmatpush1.xpose.msra.mxu0 0.0
  %1115 = vmatprep.subr.mxu0 0.0
  %1116 = vmatpush1.xpose.msra.mxu0 0.0
  %1117 = vmatprep.subr.mxu0 0.0
  %1118 = vmatpush1.xpose.msra.mxu0 0.0
  %1119 = vmatprep.mubr.f32.mxu0 0.0
  %1120 = vmatmul.mubr.f32.gmra.mrb[0].mxu0 %v1035
  %v1121 = vpop.f32.mrb[0].mxu0
  %v1122 = vadd.f32 %v1017, %v1121
  %v1123 = vpop.f32.mrb[0].mxu0
  %1124 = vmatprep.mubr.f32.mxu0 0.0
  %1125 = vmatmul.mubr.f32.gmra.mrb[0].mxu0 %v1037
  %v1126 = vpop.f32.mrb[0].mxu0
  %v1127 = vadd.f32 %v1022, %v1126
  %v1128 = vpop.f32.mrb[0].mxu0
  %1129 = vmatprep.mubr.f32.mxu0 0.0
  %1130 = vmatmul.mubr.f32.gmra.mrb[0].mxu0 %v1039
  %v1131 = vpop.f32.mrb[0].mxu0
  %v1132 = vadd.f32 %v1027, %v1131
  %v1133 = vpop.f32.mrb[0].mxu0
  %1134 = vmatprep.mubr.f32.mxu0 0.0
  %1135 = vmatmul.mubr.f32.gmra.mrb[0].mxu0 %v1041
  %v1136 = vpop.f32.mrb[0].mxu0
  %v1137 = vadd.f32 %v1032, %v1136
  %v1138 = vpop.f32.mrb[0].mxu0
  %1139 = vdwg.mxu0
  %v1140 = vmul.f32 %v1122, 0.088388346
  %v1141 = vmul.f32 %v1127, 0.088388346
  %v1142 = vmul.f32 %v1132, 0.088388346
  %v1143 = vmul.f32 %v1137, 0.088388346
  %v1144 = vadd.f32 %v1140, %v773
  %v1145 = vadd.f32 %v1141, %v774
  %v1146 = vadd.f32 %v1142, %v775
  %v1147 = vadd.f32 %v1143, %v776
  %vm1148 = vcmask 261120
  %v1149 = vsel %vm1148, %v1144, -inf
  %1150 = vmax.xlane.f32.xlu0 %v1149
  %v1151 = vpop.xlane.xlu0 %1150
  %v1152 = vsel %vm1148, %v1145, -inf
  %1153 = vmax.xlane.f32.xlu0 %v1152
  %v1154 = vpop.xlane.xlu0 %1153
  %v1155 = vsel %vm1148, %v1146, -inf
  %1156 = vmax.xlane.f32.xlu0 %v1155
  %v1157 = vpop.xlane.xlu0 %1156
  %v1158 = vsel %vm1148, %v1147, -inf
  %1159 = vmax.xlane.f32.xlu0 %v1158
  %v1160 = vpop.xlane.xlu0 %1159
  %v1161 = vsub.f32 %v1144, %v1151
  %v1162 = vsub.f32 %v1145, %v1154
  %v1163 = vsub.f32 %v1146, %v1157
  %v1164 = vsub.f32 %v1147, %v1160
  %v1165 = vmul.f32 %v1161, 1.442695
  %v1166 = vpow.pop %v1165
  %v1167 = vmul.f32 %v1162, 1.442695
  %v1168 = vpow.pop %v1167
  %v1169 = vmul.f32 %v1163, 1.442695
  %v1170 = vpow.pop %v1169
  %v1171 = vmul.f32 %v1164, 1.442695
  %v1172 = vpow.pop %v1171
  %v1173 = vsel %vm1148, %v1166, 0.0
  %1174 = vadd.xlane.f32.xlu0 %v1173
  %v1175 = vpop.xlane.xlu0 %1174
  %v1176 = vsel %vm1148, %v1168, 0.0
  %1177 = vadd.xlane.f32.xlu0 %v1176
  %v1178 = vpop.xlane.xlu0 %1177
  %v1179 = vsel %vm1148, %v1170, 0.0
  %1180 = vadd.xlane.f32.xlu0 %v1179
  %v1181 = vpop.xlane.xlu0 %1180
  %v1182 = vsel %vm1148, %v1172, 0.0
  %1183 = vadd.xlane.f32.xlu0 %v1182
  %v1184 = vpop.xlane.xlu0 %1183
  %v1185 = vrcp.pop %v1175
  %v1186 = vrcp.pop %v1178
  %v1187 = vrcp.pop %v1181
  %v1188 = vrcp.pop %v1184
  %v1189 = vmul.f32 %v1166, %v1185
  %v1190 = vmul.f32 %v1168, %v1186
  %v1191 = vmul.f32 %v1170, %v1187
  %v1192 = vmul.f32 %v1172, %v1188
  %1197 = vrot.lane.b32.xlu0 %v586, 64
  %v1198 = vpop.permute.xlu0 %1197
  %1199 = vrot.lane.b32.xlu0 %v588, 64
  %v1200 = vpop.permute.xlu0 %1199
  %1201 = vrot.lane.b32.xlu0 %v592, 64
  %v1202 = vpop.permute.xlu0 %1201
  %1203 = vrot.lane.b32.xlu0 %v594, 64
  %v1204 = vpop.permute.xlu0 %1203
  %1205 = vrot.lane.b32.xlu0 %v598, 64
  %v1206 = vpop.permute.xlu0 %1205
  %1207 = vrot.lane.b32.xlu0 %v600, 64
  %v1208 = vpop.permute.xlu0 %1207
  %1209 = vrot.lane.b32.xlu0 %v604, 64
  %v1210 = vpop.permute.xlu0 %1209
  %1211 = vrot.lane.b32.xlu0 %v606, 64
  %v1212 = vpop.permute.xlu0 %1211
  %v1213 = vsel %vm244, %v1198, %v1200
  %v1214 = vsel %vm244, %v1202, %v1204
  %v1215 = vsel %vm244, %v1206, %v1208
  %v1216 = vsel %vm244, %v1210, %v1212
  %v1222 = vsel %vm1148, %v1189, 0
  %v1225 = vsel %vm1148, %v1190, 0
  %v1228 = vsel %vm1148, %v1191, 0
  %v1231 = vsel %vm1148, %v1192, 0
  %1233 = vmatprep.subr.mxu0 0.0
  %1234 = vmatpush1.msra.mxu0 %v1213
  %1235 = vmatprep.subr.mxu0 0.0
  %1236 = vmatpush1.msra.mxu0 %v1214
  %1237 = vmatprep.subr.mxu0 0.0
  %1238 = vmatpush1.msra.mxu0 %v1215
  %1239 = vmatprep.subr.mxu0 0.0
  %1240 = vmatpush1.msra.mxu0 %v1216
  %1241 = vmatprep.subr.mxu0 0.0
  %1242 = vmatpush1.msra.mxu0 0.0
  %1243 = vmatprep.subr.mxu0 0.0
  %1244 = vmatpush1.msra.mxu0 0.0
  %1245 = vmatprep.subr.mxu0 0.0
  %1246 = vmatpush1.msra.mxu0 0.0
  %1247 = vmatprep.subr.mxu0 0.0
  %1248 = vmatpush1.msra.mxu0 0.0
  %1249 = vmatprep.subr.mxu0 0.0
  %1250 = vmatpush1.msra.mxu0 0.0
  %1251 = vmatprep.subr.mxu0 0.0
  %1252 = vmatpush1.msra.mxu0 0.0
  %1253 = vmatprep.subr.mxu0 0.0
  %1254 = vmatpush1.msra.mxu0 0.0
  %1255 = vmatprep.subr.mxu0 0.0
  %1256 = vmatpush1.msra.mxu0 0.0
  %1257 = vmatprep.subr.mxu0 0.0
  %1258 = vmatpush1.msra.mxu0 0.0
  %1259 = vmatprep.subr.mxu0 0.0
  %1260 = vmatpush1.msra.mxu0 0.0
  %1261 = vmatprep.subr.mxu0 0.0
  %1262 = vmatpush1.msra.mxu0 0.0
  %1263 = vmatprep.subr.mxu0 0.0
  %1264 = vmatpush1.msra.mxu0 0.0
  %1265 = vmatprep.subr.mxu0 0.0
  %1266 = vmatpush1.msra.mxu0 0.0
  %1267 = vmatprep.subr.mxu0 0.0
  %1268 = vmatpush1.msra.mxu0 0.0
  %1269 = vmatprep.subr.mxu0 0.0
  %1270 = vmatpush1.msra.mxu0 0.0
  %1271 = vmatprep.subr.mxu0 0.0
  %1272 = vmatpush1.msra.mxu0 0.0
  %1273 = vmatprep.subr.mxu0 0.0
  %1274 = vmatpush1.msra.mxu0 0.0
  %1275 = vmatprep.subr.mxu0 0.0
  %1276 = vmatpush1.msra.mxu0 0.0
  %1277 = vmatprep.subr.mxu0 0.0
  %1278 = vmatpush1.msra.mxu0 0.0
  %1279 = vmatprep.subr.mxu0 0.0
  %1280 = vmatpush1.msra.mxu0 0.0
  %1281 = vmatprep.subr.mxu0 0.0
  %1282 = vmatpush1.msra.mxu0 0.0
  %1283 = vmatprep.subr.mxu0 0.0
  %1284 = vmatpush1.msra.mxu0 0.0
  %1285 = vmatprep.subr.mxu0 0.0
  %1286 = vmatpush1.msra.mxu0 0.0
  %1287 = vmatprep.subr.mxu0 0.0
  %1288 = vmatpush1.msra.mxu0 0.0
  %1289 = vmatprep.subr.mxu0 0.0
  %1290 = vmatpush1.msra.mxu0 0.0
  %1291 = vmatprep.subr.mxu0 0.0
  %1292 = vmatpush1.msra.mxu0 0.0
  %1293 = vmatprep.subr.mxu0 0.0
  %1294 = vmatpush1.msra.mxu0 0.0
  %1295 = vmatprep.subr.mxu0 0.0
  %1296 = vmatpush1.msra.mxu0 0.0
  %1297 = vmatprep.mubr.f32.mxu0 0.0
  %1298 = vmatmul.mubr.f32.gmra.mrb[0].mxu0 %v1222
  %v1299 = vpop.f32.mrb[0].mxu0
  %v1300 = vadd.f32 0.0, %v1299
  %v1301 = vpop.f32.mrb[0].mxu0
  %1302 = vmatprep.mubr.f32.mxu0 0.0
  %1303 = vmatmul.mubr.f32.gmra.mrb[0].mxu0 %v1225
  %v1304 = vpop.f32.mrb[0].mxu0
  %v1305 = vadd.f32 0.0, %v1304
  %v1306 = vpop.f32.mrb[0].mxu0
  %1307 = vmatprep.mubr.f32.mxu0 0.0
  %1308 = vmatmul.mubr.f32.gmra.mrb[0].mxu0 %v1228
  %v1309 = vpop.f32.mrb[0].mxu0
  %v1310 = vadd.f32 0.0, %v1309
  %v1311 = vpop.f32.mrb[0].mxu0
  %1312 = vmatprep.mubr.f32.mxu0 0.0
  %1313 = vmatmul.mubr.f32.gmra.mrb[0].mxu0 %v1231
  %v1314 = vpop.f32.mrb[0].mxu0
  %v1315 = vadd.f32 0.0, %v1314
  %v1316 = vpop.f32.mrb[0].mxu0
  %1317 = vdwg.mxu0
  %v1318 = vld [vmem:[%s12] sm:$0xff]
  %v1319 = vld [vmem:[%s12 + $0x8] sm:$0xff]
  %v1320 = vld [vmem:[%s12 + $0x10] sm:$0xff]
  %v1321 = vld [vmem:[%s12 + $0x18] sm:$0xff]
  %v1322 = vld [vmem:[%s12 + $0x20] sm:$0xff]
  %v1323 = vld [vmem:[%s12 + $0x28] sm:$0xff]
  %v1324 = vld [vmem:[%s12 + $0x30] sm:$0xff]
  %v1325 = vld [vmem:[%s12 + $0x38] sm:$0xff]
  %v1326 = vld [vmem:[%s12 + $0x40] sm:$0xff]
  %v1327 = vld [vmem:[%s12 + $0x48] sm:$0xff]
  %v1328 = vld [vmem:[%s12 + $0x50] sm:$0xff]
  %v1329 = vld [vmem:[%s12 + $0x58] sm:$0xff]
  %v1330 = vld [vmem:[%s12 + $0x60] sm:$0xff]
  %v1331 = vld [vmem:[%s12 + $0x68] sm:$0xff]
  %v1332 = vld [vmem:[%s12 + $0x70] sm:$0xff]
  %v1333 = vld [vmem:[%s12 + $0x78] sm:$0xff]
  %1334 = vmatprep.subr.mxu0 0.0
  %1335 = vmatpush1.msra.mxu0 %v1318
  %1336 = vmatprep.subr.mxu0 0.0
  %1337 = vmatpush1.msra.mxu0 %v1319
  %1338 = vmatprep.subr.mxu0 0.0
  %1339 = vmatpush1.msra.mxu0 %v1320
  %1340 = vmatprep.subr.mxu0 0.0
  %1341 = vmatpush1.msra.mxu0 %v1321
  %1342 = vmatprep.subr.mxu0 0.0
  %1343 = vmatpush1.msra.mxu0 %v1322
  %1344 = vmatprep.subr.mxu0 0.0
  %1345 = vmatpush1.msra.mxu0 %v1323
  %1346 = vmatprep.subr.mxu0 0.0
  %1347 = vmatpush1.msra.mxu0 %v1324
  %1348 = vmatprep.subr.mxu0 0.0
  %1349 = vmatpush1.msra.mxu0 %v1325
  %1350 = vmatprep.subr.mxu0 0.0
  %1351 = vmatpush1.msra.mxu0 %v1326
  %1352 = vmatprep.subr.mxu0 0.0
  %1353 = vmatpush1.msra.mxu0 %v1327
  %1354 = vmatprep.subr.mxu0 0.0
  %1355 = vmatpush1.msra.mxu0 %v1328
  %1356 = vmatprep.subr.mxu0 0.0
  %1357 = vmatpush1.msra.mxu0 %v1329
  %1358 = vmatprep.subr.mxu0 0.0
  %1359 = vmatpush1.msra.mxu0 %v1330
  %1360 = vmatprep.subr.mxu0 0.0
  %1361 = vmatpush1.msra.mxu0 %v1331
  %1362 = vmatprep.subr.mxu0 0.0
  %1363 = vmatpush1.msra.mxu0 %v1332
  %1364 = vmatprep.subr.mxu0 0.0
  %1365 = vmatpush1.msra.mxu0 %v1333
  %1366 = vmatprep.subr.mxu0 0.0
  %1367 = vmatpush1.msra.mxu0 0.0
  %1368 = vmatprep.subr.mxu0 0.0
  %1369 = vmatpush1.msra.mxu0 0.0
  %1370 = vmatprep.subr.mxu0 0.0
  %1371 = vmatpush1.msra.mxu0 0.0
  %1372 = vmatprep.subr.mxu0 0.0
  %1373 = vmatpush1.msra.mxu0 0.0
  %1374 = vmatprep.subr.mxu0 0.0
  %1375 = vmatpush1.msra.mxu0 0.0
  %1376 = vmatprep.subr.mxu0 0.0
  %1377 = vmatpush1.msra.mxu0 0.0
  %1378 = vmatprep.subr.mxu0 0.0
  %1379 = vmatpush1.msra.mxu0 0.0
  %1380 = vmatprep.subr.mxu0 0.0
  %1381 = vmatpush1.msra.mxu0 0.0
  %1382 = vmatprep.subr.mxu0 0.0
  %1383 = vmatpush1.msra.mxu0 0.0
  %1384 = vmatprep.subr.mxu0 0.0
  %1385 = vmatpush1.msra.mxu0 0.0
  %1386 = vmatprep.subr.mxu0 0.0
  %1387 = vmatpush1.msra.mxu0 0.0
  %1388 = vmatprep.subr.mxu0 0.0
  %1389 = vmatpush1.msra.mxu0 0.0
  %1390 = vmatprep.subr.mxu0 0.0
  %1391 = vmatpush1.msra.mxu0 0.0
  %1392 = vmatprep.subr.mxu0 0.0
  %1393 = vmatpush1.msra.mxu0 0.0
  %1394 = vmatprep.subr.mxu0 0.0
  %1395 = vmatpush1.msra.mxu0 0.0
  %1396 = vmatprep.subr.mxu0 0.0
  %1397 = vmatpush1.msra.mxu0 0.0
  %1398 = vmatprep.mubr.f32.mxu0 0.0
  %1399 = vmatmul.mubr.f32.gmra.mrb[0].mxu0 %v1300
  %v1400 = vpop.f32.mrb[0].mxu0
  %v1401 = vadd.f32 0.0, %v1400
  %v1402 = vpop.f32.mrb[0].mxu0
  %1403 = vmatprep.mubr.f32.mxu0 0.0
  %1404 = vmatmul.mubr.f32.gmra.mrb[0].mxu0 %v1305
  %v1405 = vpop.f32.mrb[0].mxu0
  %v1406 = vadd.f32 0.0, %v1405
  %v1407 = vpop.f32.mrb[0].mxu0
  %1408 = vmatprep.mubr.f32.mxu0 0.0
  %1409 = vmatmul.mubr.f32.gmra.mrb[0].mxu0 %v1310
  %v1410 = vpop.f32.mrb[0].mxu0
  %v1411 = vadd.f32 0.0, %v1410
  %v1412 = vpop.f32.mrb[0].mxu0
  %1413 = vmatprep.mubr.f32.mxu0 0.0
  %1414 = vmatmul.mubr.f32.gmra.mrb[0].mxu0 %v1315
  %v1415 = vpop.f32.mrb[0].mxu0
  %v1416 = vadd.f32 0.0, %v1415
  %v1417 = vpop.f32.mrb[0].mxu0
  %1418 = vdwg.mxu0
  %v1419 = vadd.f32 %v59, %v1401
  %v1420 = vadd.f32 %v60, %v1406
  %v1421 = vadd.f32 %v61, %v1411
  %v1422 = vadd.f32 %v62, %v1416
  %v1423 = vld [vmem:[%s13] sm:$0x1]
  %v1425 = vlaneseq
  %v1426 = vshrl.u32 %v1425, 7
  %v1427 = vsub.s32 0, %v1426
  %v1428 = vrot.slane %v1423, %v1427
  %v1430 = vadd.f32 %v1419, %v1428
  %v1431 = vadd.f32 %v1420, %v1428
  %v1432 = vadd.f32 %v1421, %v1428
  %v1433 = vadd.f32 %v1422, %v1428
  %1434 = vst [vmem:[%s18] sm:$0xff] %v1430
  %1435 = vst [vmem:[%s18 + $0x8] sm:$0xff] %v1431
  %1436 = vst [vmem:[%s18 + $0x10] sm:$0xff] %v1432
  %1437 = vst [vmem:[%s18 + $0x18] sm:$0xff] %v1433
  // Predicated region
  $region74: #{_lambda_.4} parent=0 // pred_check
    _
  $region75: #{_lambda_.4} parent=0 // pred_check_branch
    %1439 = sbr.rel (0) target = $region77
  $region76: #{_lambda_.4} parent=0 // pred_region
    _
  $region77: #{_lambda_.4} parent=0 // pred_fallthru
    _
  // Predicated region
  $region78: #{_lambda_.4} parent=0 // pred_check
    _
  $region79: #{_lambda_.4} parent=0 // pred_check_branch
    %1441 = sbr.rel (0) target = $region81
  $region80: #{_lambda_.4} parent=0 // pred_region
    _
  $region81: #{_lambda_.4} parent=0 // pred_fallthru
    _

</llo_original>
